<compile_context>
chip_gen: v5e
topology: v5e:2x2
jax: 0.10.0
libtpu: 0.0.40
codegen_flags: <defaults>
</compile_context>

<pallas_src>
import functools

import jax
import jax.numpy as jnp
import numpy as np
from jax.experimental import pallas as pl
from jax.experimental.pallas import tpu as pltpu

LN_EPS = 1e-5  # PyTorch nn.LayerNorm default

# f32 row-slab layout (16, H): biases / LN params / output head in one resident array.
_R_B1, _R_G1, _R_BT1, _R_B2, _R_G2, _R_BT2, _R_B3 = 0, 1, 2, 3, 4, 5, 6
_R_W3 = 8            # rows 8..15: output-layer weights replicated across 8 sublanes
_ROWSLAB_ROWS = 16


def _round_up(x, m):
    return (x + m - 1) // m * m


def _layernorm(x, gamma, beta):
    # E[x^2] - mu^2: two independent XLU reductions overlap; rsqrt lands on the EUP slot.
    mu = jnp.mean(x, axis=-1, keepdims=True)
    ex2 = jnp.mean(x * x, axis=-1, keepdims=True)
    var = jnp.maximum(ex2 - mu * mu, 0.0)
    return (x - mu) * jax.lax.rsqrt(var + LN_EPS) * gamma + beta


def _critic_kernel(xin_ref, w_ref, rs_ref, out_ref, *, Fp, h0, h1):
    # xin: (tb, Fp) bf16 = [obs | act | feature-pad], already cast wrapper-side.
    xin = xin_ref[...]

    # ---- layer 1: cat @ W1_padded (+ b1, LN, ReLU) -- bf16 MXU, f32 accumulate ----
    x = jnp.dot(xin, w_ref[0:Fp, :h0],
                preferred_element_type=jnp.float32) + rs_ref[_R_B1:_R_B1 + 1, :h0]
    x = _layernorm(x, rs_ref[_R_G1:_R_G1 + 1, :h0], rs_ref[_R_BT1:_R_BT1 + 1, :h0])
    x = jnp.maximum(x, 0.0)

    # ---- layer 2: cat((x, act)) @ W2 == x @ W2_h + cat @ W2_a_padded (+ b2, LN, ReLU) ----
    y = (jnp.dot(x.astype(jnp.bfloat16), w_ref[2 * Fp:2 * Fp + h0, :h1],
                 preferred_element_type=jnp.float32)
         + jnp.dot(xin, w_ref[Fp:2 * Fp, :h1],
                   preferred_element_type=jnp.float32)
         + rs_ref[_R_B2:_R_B2 + 1, :h1])
    y = _layernorm(y, rs_ref[_R_G2:_R_G2 + 1, :h1], rs_ref[_R_BT2:_R_BT2 + 1, :h1])
    y = jnp.maximum(y, 0.0)

    # ---- output layer (out_features=1), lane-dense ----
    # q[r, i] = sum_j w3[j] * y[i, j]; w3 is pre-replicated on 8 sublanes so the MXU
    # trans-B dot emits an (8, tb) lane-major block (unmasked stores); row 0 is kept
    # by the wrapper.
    w3_rep = rs_ref[_R_W3:_R_W3 + 8, :h1]                       # (8, h1) f32
    q = jax.lax.dot_general(w3_rep, y, (((1,), (1,)), ((), ())),
                            preferred_element_type=jnp.float32)  # (8, tb)
    out_ref[...] = q + rs_ref[_R_B3:_R_B3 + 1, 0:1]


def continuous_critic_forward(obs, act, params, *, batch_tile=1024):
    d = params["dims"]
    obs_sp, act_sp, h0, h1, Fp = d["obs_sp"], d["act_sp"], d["h0"], d["h1"], d["Fp"]
    w_slab, row_slab = params["w_slab"], params["row_slab"]
    B = obs.shape[0]
    F = obs_sp + act_sp

    # One bf16 activation stream instead of two f32 ones (cast + concat once, outside).
    xin = jnp.concatenate([obs, act], axis=1).astype(jnp.bfloat16)
    if Fp != F:
        xin = jnp.pad(xin, ((0, 0), (0, Fp - F)))

    # Batch tiling: whole batch in one grid step when it fits; otherwise 128-multiple
    # tiles (lane-dense output block needs tb % 128 == 0) with an even tile count so
    # v7x's two TensorCores get balanced work. Tile clamped for v7x's 64 MiB VMEM.
    batch_tile = max(128, min(batch_tile, 8192))
    bp8 = _round_up(B, 8)
    if bp8 <= batch_tile:
        tb, n_tiles = bp8, 1
    else:
        tb = _round_up(min(batch_tile, bp8), 128)
        n_tiles = pl.cdiv(bp8, tb)
        if n_tiles % 2 == 1:
            n_tiles += 1
            tb = _round_up(pl.cdiv(bp8, n_tiles), 128)
    bp = tb * n_tiles
    if bp != B:
        xin = jnp.pad(xin, ((0, bp - B), (0, 0)))

    kernel = functools.partial(_critic_kernel, Fp=Fp, h0=h0, h1=h1)

    in_specs = [
        pl.BlockSpec((tb, Fp), lambda i: (i, 0)),          # per-tile activations (bf16)
        pl.BlockSpec(w_slab.shape, lambda i: (0, 0)),      # resident bf16 weight slab
        pl.BlockSpec(row_slab.shape, lambda i: (0, 0)),    # resident f32 bias/LN/head slab
    ]
    out_specs = pl.BlockSpec((8, tb), lambda i: (0, i))    # lane-dense q rows

    flops = 2 * bp * (Fp * h0 + Fp * h1 + h0 * h1 + 8 * h1)
    bytes_accessed = (2 * bp * Fp + 4 * 8 * bp + 2 * w_slab.size + 4 * row_slab.size)
    cost = pl.CostEstimate(flops=int(flops), transcendentals=int(2 * bp),
                           bytes_accessed=int(bytes_accessed))

    out = pl.pallas_call(
        kernel,
        out_shape=jax.ShapeDtypeStruct((8, bp), jnp.float32),
        grid_spec=pltpu.PrefetchScalarGridSpec(
            num_scalar_prefetch=0,
            grid=(bp // tb,),
            in_specs=in_specs,
            out_specs=out_specs,
        ),
        compiler_params=pltpu.CompilerParams(
            dimension_semantics=("parallel",)),
        cost_estimate=cost,
    )(xin, w_slab, row_slab)

    # Row 0 carries q for every batch row; padded rows are garbage and sliced off.
    return out[0, :B].reshape(B, 1)


def init_params(key, obs_sp, act_sp, hidden_size=(64, 64)):
    """Synthetic init mirroring ContinuousCritic.__init__ / reset_parameters
    (hidden_init uses weight.size()[0] == out_features), packed into kernel slabs."""
    if len(hidden_size) != 2:
        raise ValueError("'hidden_size' must be of length 2")
    h0, h1 = hidden_size
    F = obs_sp + act_sp
    Fp = _round_up(F, 8)
    H = max(h0, h1)
    ks = jax.random.split(key, 6)

    lim1 = 1.0 / np.sqrt(h0)
    w1 = jax.random.uniform(ks[0], (h0, obs_sp), jnp.float32, -lim1, lim1)
    b1 = jax.random.uniform(ks[1], (h0,), jnp.float32,
                            -1.0 / np.sqrt(obs_sp), 1.0 / np.sqrt(obs_sp))
    lim2 = 1.0 / np.sqrt(h1)
    w2 = jax.random.uniform(ks[2], (h1, h0 + act_sp), jnp.float32, -lim2, lim2)
    b2 = jax.random.uniform(ks[3], (h1,), jnp.float32,
                            -1.0 / np.sqrt(h0 + act_sp), 1.0 / np.sqrt(h0 + act_sp))
    w3 = jax.random.uniform(ks[4], (1, h1), jnp.float32, -0.003, 0.003)
    b3 = jax.random.uniform(ks[5], (1,), jnp.float32,
                            -1.0 / np.sqrt(h1), 1.0 / np.sqrt(h1))
    g1 = jnp.ones((h0,), jnp.float32); bt1 = jnp.zeros((h0,), jnp.float32)
    g2 = jnp.ones((h1,), jnp.float32); bt2 = jnp.zeros((h1,), jnp.float32)

    # bf16 weight slab (2*Fp + h0, H):
    #   rows [0 , Fp)        : W1^T with act/pad feature rows zeroed  -> cat @ . == obs @ W1^T
    #   rows [Fp, 2*Fp)      : W2_act^T with obs/pad feature rows zeroed -> cat @ . == act @ W2a^T
    #   rows [2*Fp, 2*Fp+h0) : W2_hidden^T
    w_slab = np.zeros((2 * Fp + h0, H), np.float32)
    w_slab[0:obs_sp, 0:h0] = np.asarray(w1).T
    w_slab[Fp + obs_sp:Fp + F, 0:h1] = np.asarray(w2)[:, h0:].T
    w_slab[2 * Fp:2 * Fp + h0, 0:h1] = np.asarray(w2)[:, :h0].T
    w_slab = jnp.asarray(w_slab, jnp.bfloat16)

    # f32 row slab (16, H): b1,g1,bt1,b2,g2,bt2,b3 rows + output weights replicated x8.
    row_slab = np.zeros((_ROWSLAB_ROWS, H), np.float32)
    row_slab[_R_B1, :h0] = np.asarray(b1)
    row_slab[_R_G1, :h0] = np.asarray(g1)
    row_slab[_R_BT1, :h0] = np.asarray(bt1)
    row_slab[_R_B2, :h1] = np.asarray(b2)
    row_slab[_R_G2, :h1] = np.asarray(g2)
    row_slab[_R_BT2, :h1] = np.asarray(bt2)
    row_slab[_R_B3, :] = float(np.asarray(b3)[0])
    row_slab[_R_W3:_R_W3 + 8, :h1] = np.asarray(w3)[0]
    row_slab = jnp.asarray(row_slab, jnp.float32)

    raw = dict(w1=w1, b1=b1, w2=w2, b2=b2, g1=g1, bt1=bt1, g2=g2, bt2=bt2, w3=w3, b3=b3)
    return {
        "w_slab": w_slab,
        "row_slab": row_slab,
        "raw": raw,
        "dims": dict(obs_sp=obs_sp, act_sp=act_sp, h0=h0, h1=h1, Fp=Fp),
    }


def reference_forward(obs, act, params):
    """Pure-JAX reference using the same bf16-operand / f32-accumulate recipe.
    Note: this matches the kernel's numerics; it is not a true-f32 PyTorch oracle."""
    raw, h0 = params["raw"], params["dims"]["h0"]

    def ln(x, g, b):
        mu = x.mean(-1, keepdims=True)
        ex2 = (x * x).mean(-1, keepdims=True)
        var = jnp.maximum(ex2 - mu * mu, 0.0)
        return (x - mu) * jax.lax.rsqrt(var + LN_EPS) * g + b

    w1T = raw["w1"].T.astype(jnp.bfloat16)
    w2hT = raw["w2"][:, :h0].T.astype(jnp.bfloat16)
    w2aT = raw["w2"][:, h0:].T.astype(jnp.bfloat16)

    x = jnp.dot(obs.astype(jnp.bfloat16), w1T,
                preferred_element_type=jnp.float32) + raw["b1"]
    x = jnp.maximum(ln(x, raw["g1"], raw["bt1"]), 0.0)
    y = (jnp.dot(x.astype(jnp.bfloat16), w2hT, preferred_element_type=jnp.float32)
         + jnp.dot(act.astype(jnp.bfloat16), w2aT, preferred_element_type=jnp.float32)
         + raw["b2"])
    y = jnp.maximum(ln(y, raw["g2"], raw["bt2"]), 0.0)
    return jnp.sum(y * raw["w3"][0], axis=-1, keepdims=True) + raw["b3"]


if __name__ == "__main__":
    key = jax.random.PRNGKey(0)
    k_obs, k_act, k_par = jax.random.split(key, 3)

    B, OBS_SP, ACT_SP = 300, 12, 4
    obs = jax.random.normal(k_obs, (B, OBS_SP), jnp.float32)
    act = jax.random.normal(k_act, (B, ACT_SP), jnp.float32)
    params = init_params(k_par, OBS_SP, ACT_SP, hidden_size=(64, 64))

    ref = reference_forward(obs, act, params)

    # Default config: whole padded batch in a single grid step.
    out = continuous_critic_forward(obs, act, params)
    out = jax.block_until_ready(out)
    assert out.shape == (B, 1), out.shape
    np.testing.assert_allclose(np.asarray(out), np.asarray(ref), rtol=5e-3, atol=5e-3)

    # Also exercise the multi-tile path (forced small tile -> 4 tiles of 128, even count).
    out2 = continuous_critic_forward(obs, act, params, batch_tile=128)
    out2 = jax.block_until_ready(out2)
    np.testing.assert_allclose(np.asarray(out2), np.asarray(ref), rtol=5e-3, atol=5e-3)

    print("KERNEL_OK")
</pallas_src>

<mosaic_0001>
module attributes {stable_mosaic.version = 11 : i64} {
  func.func @_critic_kernel(%arg0: i32, %arg1: memref<304x16xbf16, #tpu.memory_space<vmem>>, %arg2: memref<96x64xbf16, #tpu.memory_space<vmem>>, %arg3: memref<16x64xf32, #tpu.memory_space<vmem>>, %arg4: memref<8x304xf32, #tpu.memory_space<vmem>>) attributes {dimension_semantics = [#tpu.dimension_semantics<parallel>], iteration_bounds = array<i64: 1>, scalar_prefetch = 0 : i64, scratch_operands = 0 : i64, tpu.core_type = #tpu.core_type<tc>, window_params = [{transform_indices = @transform_0, window_bounds = array<i64: 304, 16>}, {pipeline_mode = #tpu.pipeline_mode<synchronous>, transform_indices = @transform_1, window_bounds = array<i64: 96, 64>}, {pipeline_mode = #tpu.pipeline_mode<synchronous>, transform_indices = @transform_2, window_bounds = array<i64: 16, 64>}, {transform_indices = @transform_3, window_bounds = array<i64: 8, 304>}]} {
    %c0 = arith.constant 0 : index
    %c0_0 = arith.constant 0 : index
    %0 = vector.load %arg1[%c0, %c0_0] : memref<304x16xbf16, #tpu.memory_space<vmem>>, vector<304x16xbf16>
    %c0_1 = arith.constant 0 : index
    %c0_2 = arith.constant 0 : index
    %1 = vector.load %arg2[%c0_1, %c0_2] : memref<96x64xbf16, #tpu.memory_space<vmem>>, vector<16x64xbf16>
    %cst = arith.constant dense<0.000000e+00> : vector<304x64xf32>
    %2 = tpu.matmul %0, %1, %cst {dimension_numbers = #tpu.dot_dimension_numbers<[1], [0], [0], [1], [0, 0, 1, 1], [], []>} : vector<304x16xbf16>, vector<16x64xbf16>, vector<304x64xf32> -> vector<304x64xf32>
    %c0_3 = arith.constant 0 : index
    %c0_4 = arith.constant 0 : index
    %3 = vector.load %arg3[%c0_3, %c0_4] : memref<16x64xf32, #tpu.memory_space<vmem>>, vector<1x64xf32>
    %4 = vector.broadcast %3 : vector<1x64xf32> to vector<304x64xf32>
    %5 = arith.addf %2, %4 : vector<304x64xf32>
    %c1 = arith.constant 1 : index
    %c0_5 = arith.constant 0 : index
    %6 = vector.load %arg3[%c1, %c0_5] : memref<16x64xf32, #tpu.memory_space<vmem>>, vector<1x64xf32>
    %c2 = arith.constant 2 : index
    %c0_6 = arith.constant 0 : index
    %7 = vector.load %arg3[%c2, %c0_6] : memref<16x64xf32, #tpu.memory_space<vmem>>, vector<1x64xf32>
    %cst_7 = arith.constant dense<0.000000e+00> : vector<304xf32>
    %8 = vector.multi_reduction <add>, %5, %cst_7 [1] : vector<304x64xf32> to vector<304xf32>
    %9 = vector.shape_cast %8 : vector<304xf32> to vector<304x1xf32>
    %cst_8 = arith.constant 6.400000e+01 : f32
    %10 = vector.broadcast %cst_8 : f32 to vector<304x1xf32>
    %11 = arith.divf %9, %10 : vector<304x1xf32>
    %12 = arith.mulf %5, %5 : vector<304x64xf32>
    %cst_9 = arith.constant dense<0.000000e+00> : vector<304xf32>
    %13 = vector.multi_reduction <add>, %12, %cst_9 [1] : vector<304x64xf32> to vector<304xf32>
    %14 = vector.shape_cast %13 : vector<304xf32> to vector<304x1xf32>
    %cst_10 = arith.constant 6.400000e+01 : f32
    %15 = vector.broadcast %cst_10 : f32 to vector<304x1xf32>
    %16 = arith.divf %14, %15 : vector<304x1xf32>
    %17 = arith.mulf %11, %11 : vector<304x1xf32>
    %18 = arith.subf %16, %17 : vector<304x1xf32>
    %cst_11 = arith.constant 0.000000e+00 : f32
    %19 = vector.broadcast %cst_11 : f32 to vector<304x1xf32>
    %20 = arith.maximumf %18, %19 : vector<304x1xf32>
    %21 = vector.broadcast %11 : vector<304x1xf32> to vector<304x64xf32>
    %22 = arith.subf %5, %21 : vector<304x64xf32>
    %cst_12 = arith.constant 9.99999974E-6 : f32
    %23 = vector.broadcast %cst_12 : f32 to vector<304x1xf32>
    %24 = arith.addf %20, %23 : vector<304x1xf32>
    %25 = math.rsqrt %24 : vector<304x1xf32>
    %26 = vector.broadcast %25 : vector<304x1xf32> to vector<304x64xf32>
    %27 = arith.mulf %22, %26 : vector<304x64xf32>
    %28 = vector.broadcast %6 : vector<1x64xf32> to vector<304x64xf32>
    %29 = arith.mulf %27, %28 : vector<304x64xf32>
    %30 = vector.broadcast %7 : vector<1x64xf32> to vector<304x64xf32>
    %31 = arith.addf %29, %30 : vector<304x64xf32>
    %cst_13 = arith.constant 0.000000e+00 : f32
    %32 = vector.broadcast %cst_13 : f32 to vector<304x64xf32>
    %33 = arith.maximumf %31, %32 : vector<304x64xf32>
    %34 = arith.truncf %33 : vector<304x64xf32> to vector<304x64xbf16>
    %c32 = arith.constant 32 : index
    %c0_14 = arith.constant 0 : index
    %35 = vector.load %arg2[%c32, %c0_14] : memref<96x64xbf16, #tpu.memory_space<vmem>>, vector<64x64xbf16>
    %cst_15 = arith.constant dense<0.000000e+00> : vector<304x64xf32>
    %36 = tpu.matmul %34, %35, %cst_15 {dimension_numbers = #tpu.dot_dimension_numbers<[1], [0], [0], [1], [0, 0, 1, 1], [], []>} : vector<304x64xbf16>, vector<64x64xbf16>, vector<304x64xf32> -> vector<304x64xf32>
    %c16 = arith.constant 16 : index
    %c0_16 = arith.constant 0 : index
    %37 = vector.load %arg2[%c16, %c0_16] : memref<96x64xbf16, #tpu.memory_space<vmem>>, vector<16x64xbf16>
    %cst_17 = arith.constant dense<0.000000e+00> : vector<304x64xf32>
    %38 = tpu.matmul %0, %37, %cst_17 {dimension_numbers = #tpu.dot_dimension_numbers<[1], [0], [0], [1], [0, 0, 1, 1], [], []>} : vector<304x16xbf16>, vector<16x64xbf16>, vector<304x64xf32> -> vector<304x64xf32>
    %39 = arith.addf %36, %38 : vector<304x64xf32>
    %c3 = arith.constant 3 : index
    %c0_18 = arith.constant 0 : index
    %40 = vector.load %arg3[%c3, %c0_18] : memref<16x64xf32, #tpu.memory_space<vmem>>, vector<1x64xf32>
    %41 = vector.broadcast %40 : vector<1x64xf32> to vector<304x64xf32>
    %42 = arith.addf %39, %41 : vector<304x64xf32>
    %c4 = arith.constant 4 : index
    %c0_19 = arith.constant 0 : index
    %43 = vector.load %arg3[%c4, %c0_19] : memref<16x64xf32, #tpu.memory_space<vmem>>, vector<1x64xf32>
    %c5 = arith.constant 5 : index
    %c0_20 = arith.constant 0 : index
    %44 = vector.load %arg3[%c5, %c0_20] : memref<16x64xf32, #tpu.memory_space<vmem>>, vector<1x64xf32>
    %cst_21 = arith.constant dense<0.000000e+00> : vector<304xf32>
    %45 = vector.multi_reduction <add>, %42, %cst_21 [1] : vector<304x64xf32> to vector<304xf32>
    %46 = vector.shape_cast %45 : vector<304xf32> to vector<304x1xf32>
    %cst_22 = arith.constant 6.400000e+01 : f32
    %47 = vector.broadcast %cst_22 : f32 to vector<304x1xf32>
    %48 = arith.divf %46, %47 : vector<304x1xf32>
    %49 = arith.mulf %42, %42 : vector<304x64xf32>
    %cst_23 = arith.constant dense<0.000000e+00> : vector<304xf32>
    %50 = vector.multi_reduction <add>, %49, %cst_23 [1] : vector<304x64xf32> to vector<304xf32>
    %51 = vector.shape_cast %50 : vector<304xf32> to vector<304x1xf32>
    %cst_24 = arith.constant 6.400000e+01 : f32
    %52 = vector.broadcast %cst_24 : f32 to vector<304x1xf32>
    %53 = arith.divf %51, %52 : vector<304x1xf32>
    %54 = arith.mulf %48, %48 : vector<304x1xf32>
    %55 = arith.subf %53, %54 : vector<304x1xf32>
    %cst_25 = arith.constant 0.000000e+00 : f32
    %56 = vector.broadcast %cst_25 : f32 to vector<304x1xf32>
    %57 = arith.maximumf %55, %56 : vector<304x1xf32>
    %58 = vector.broadcast %48 : vector<304x1xf32> to vector<304x64xf32>
    %59 = arith.subf %42, %58 : vector<304x64xf32>
    %cst_26 = arith.constant 9.99999974E-6 : f32
    %60 = vector.broadcast %cst_26 : f32 to vector<304x1xf32>
    %61 = arith.addf %57, %60 : vector<304x1xf32>
    %62 = math.rsqrt %61 : vector<304x1xf32>
    %63 = vector.broadcast %62 : vector<304x1xf32> to vector<304x64xf32>
    %64 = arith.mulf %59, %63 : vector<304x64xf32>
    %65 = vector.broadcast %43 : vector<1x64xf32> to vector<304x64xf32>
    %66 = arith.mulf %64, %65 : vector<304x64xf32>
    %67 = vector.broadcast %44 : vector<1x64xf32> to vector<304x64xf32>
    %68 = arith.addf %66, %67 : vector<304x64xf32>
    %cst_27 = arith.constant 0.000000e+00 : f32
    %69 = vector.broadcast %cst_27 : f32 to vector<304x64xf32>
    %70 = arith.maximumf %68, %69 : vector<304x64xf32>
    %c8 = arith.constant 8 : index
    %c0_28 = arith.constant 0 : index
    %71 = vector.load %arg3[%c8, %c0_28] : memref<16x64xf32, #tpu.memory_space<vmem>>, vector<8x64xf32>
    %cst_29 = arith.constant dense<0.000000e+00> : vector<8x304xf32>
    %72 = tpu.matmul %71, %70, %cst_29 {dimension_numbers = #tpu.dot_dimension_numbers<[1], [1], [0], [0], [0, 0, 1, 0], [], []>} : vector<8x64xf32>, vector<304x64xf32>, vector<8x304xf32> -> vector<8x304xf32>
    %c6 = arith.constant 6 : index
    %c0_30 = arith.constant 0 : index
    %73 = vector.load %arg3[%c6, %c0_30] : memref<16x64xf32, #tpu.memory_space<vmem>>, vector<1x1xf32>
    %74 = vector.broadcast %73 : vector<1x1xf32> to vector<8x304xf32>
    %75 = arith.addf %72, %74 : vector<8x304xf32>
    %c0_31 = arith.constant 0 : index
    %c0_32 = arith.constant 0 : index
    %76 = vector.load %arg4[%c0_31, %c0_32] : memref<8x304xf32, #tpu.memory_space<vmem>>, vector<8x304xf32>
    tpu.vector_store %arg4[%c0_31, %c0_32], %75 {strides = array<i32>} : memref<8x304xf32, #tpu.memory_space<vmem>>, vector<8x304xf32>,
    return
  }
  func.func @transform_0(%arg0: i32) -> (i32, i32) {
    %c0_i32 = arith.constant 0 : i32
    %c0_i32_0 = arith.constant 0 : i32
    return %arg0, %c0_i32 : i32, i32
  }
  func.func @transform_1(%arg0: i32) -> (i32, i32) {
    %c0_i32 = arith.constant 0 : i32
    %c0_i32_0 = arith.constant 0 : i32
    %c0_i32_1 = arith.constant 0 : i32
    return %c0_i32, %c0_i32_0 : i32, i32
  }
  func.func @transform_2(%arg0: i32) -> (i32, i32) {
    %c0_i32 = arith.constant 0 : i32
    %c0_i32_0 = arith.constant 0 : i32
    %c0_i32_1 = arith.constant 0 : i32
    return %c0_i32, %c0_i32_0 : i32, i32
  }
  func.func @transform_3(%arg0: i32) -> (i32, i32) {
    %c0_i32 = arith.constant 0 : i32
    %c0_i32_0 = arith.constant 0 : i32
    return %c0_i32, %arg0 : i32, i32
  }
}

</mosaic_0001>

<llo_original>
// kernel: tpu_custom_call.1
$region0: #{tpu_custom_call.1}
  #allocation0 [shape = 'u32[]', space=smem, size = 0x4, offset = 0x4, fixed_abs, tag = 'smem constant byte address 0x4 - core index']
  #allocation1 [shape = 'u32[72,128]{1,0:T(1,128)}', space=vmem, size = 0x9000, scoped, tag = 'internal scratch']
  %s0 = inlined_call_operand.vmem [shape: bf16[304,16], index: 0, kind: input, shape index: {}]
  %s1 = inlined_call_operand.vmem [shape: bf16[96,64], index: 1, kind: input, shape index: {}]
  %s2 = inlined_call_operand.vmem [shape: f32[16,64], index: 2, kind: input, shape index: {}]
  %s3 = inlined_call_operand.hbm [shape: f32[8,304], index: 3, kind: output, shape index: {}]
  %s4 = sld [smem:[#allocation0]]
  $region22: #{tpu_custom_call.1} parent=0
    _
  %s6 = ssub.s32 1, %s4
  %s7 = scalar_select 0, %s6, %s4
  $region1: #{tpu_custom_call.1} parent=0
    #allocation2 [shape = 'u8[12288]{0}', space=vmem, size = 0x3000, scoped, tag = 'output window, operand 0, single buffered']
    #allocation3 [shape = 's32[1]{0}', space=sflag, size = 0x4, scoped, tag = 'scoped memory for tpu_custom_call.1']
    %8 = vsyncpa [#allocation3], 0
    // Predicated region
    $region2: #{tpu_custom_call.1} parent=1 // pred_check
      _
    $region3: #{tpu_custom_call.1} parent=1 // pred_check_branch
      %10 = sbr.rel (0) target = $region5
    $region4: #{tpu_custom_call.1} parent=1 // pred_region
      _
    $region5: #{tpu_custom_call.1} parent=1 // pred_fallthru
      _
    // Predicated region
    $region6: #{tpu_custom_call.1} parent=1 // pred_check
      _
    $region7: #{tpu_custom_call.1} parent=1 // pred_check_branch
      %12 = sbr.rel (0) target = $region9
    $region8: #{tpu_custom_call.1} parent=1 // pred_region
      _
    $region9: #{tpu_custom_call.1} parent=1 // pred_fallthru
      _
    // Predicated region
    $region10: #{tpu_custom_call.1} parent=1 // pred_check
      _
    $region11: #{tpu_custom_call.1} parent=1 // pred_check_branch
      %14 = sbr.rel (0) target = $region13
    $region12: #{tpu_custom_call.1} parent=1 // pred_region
      _
    $region13: #{tpu_custom_call.1} parent=1 // pred_fallthru
      _
    %v16 = vld [vmem:[%s0] sm:$0xf]
    %v17 = vld [vmem:[%s0 + $0x4] sm:$0xf]
    %v18 = vld [vmem:[%s0 + $0x8] sm:$0xf]
    %v19 = vld [vmem:[%s0 + $0xc] sm:$0xf]
    %v20 = vld [vmem:[%s0 + $0x10] sm:$0xf]
    %v21 = vld [vmem:[%s0 + $0x14] sm:$0xf]
    %v22 = vld [vmem:[%s0 + $0x18] sm:$0xf]
    %v23 = vld [vmem:[%s0 + $0x1c] sm:$0xf]
    %v24 = vld [vmem:[%s0 + $0x20] sm:$0xf]
    %v25 = vld [vmem:[%s0 + $0x24] sm:$0xf]
    %v26 = vld [vmem:[%s0 + $0x28] sm:$0xf]
    %v27 = vld [vmem:[%s0 + $0x2c] sm:$0xf]
    %v28 = vld [vmem:[%s0 + $0x30] sm:$0xf]
    %v29 = vld [vmem:[%s0 + $0x34] sm:$0xf]
    %v30 = vld [vmem:[%s0 + $0x38] sm:$0xf]
    %v31 = vld [vmem:[%s0 + $0x3c] sm:$0xf]
    %v32 = vld [vmem:[%s0 + $0x40] sm:$0xf]
    %v33 = vld [vmem:[%s0 + $0x44] sm:$0xf]
    %v34 = vld [vmem:[%s0 + $0x48] sm:$0xf]
    %v35 = vld [vmem:[%s0 + $0x4c] sm:$0xf]
    %v36 = vld [vmem:[%s0 + $0x50] sm:$0xf]
    %v37 = vld [vmem:[%s0 + $0x54] sm:$0xf]
    %v38 = vld [vmem:[%s0 + $0x58] sm:$0xf]
    %v39 = vld [vmem:[%s0 + $0x5c] sm:$0xf]
    %v40 = vld [vmem:[%s0 + $0x60] sm:$0xf]
    %v41 = vld [vmem:[%s0 + $0x64] sm:$0xf]
    %v42 = vld [vmem:[%s0 + $0x68] sm:$0xf]
    %v43 = vld [vmem:[%s0 + $0x6c] sm:$0xf]
    %v44 = vld [vmem:[%s0 + $0x70] sm:$0xf]
    %v45 = vld [vmem:[%s0 + $0x74] sm:$0xf]
    %v46 = vld [vmem:[%s0 + $0x78] sm:$0xf]
    %v47 = vld [vmem:[%s0 + $0x7c] sm:$0xf]
    %v48 = vld [vmem:[%s0 + $0x80] sm:$0xf]
    %v49 = vld [vmem:[%s0 + $0x84] sm:$0xf]
    %v50 = vld [vmem:[%s0 + $0x88] sm:$0xf]
    %v51 = vld [vmem:[%s0 + $0x8c] sm:$0xf]
    %v52 = vld [vmem:[%s0 + $0x90] sm:$0xf]
    %v53 = vld [vmem:[%s0 + $0x94] sm:$0xf]
    %v54 = vld [vmem:[%s1] sm:$0xf]
    %v55 = vld [vmem:[%s1 + $0x4] sm:$0xf]
    %v56 = vld [vmem:[%s2] sm:$0x1]
    %v57 = vperm.slane %v56, 0
    %v96 = vunpack.c.l.b16 %v16
    %v97 = vunpack.c.l.b16 %v17
    %v98 = vunpack.c.l.b16 %v18
    %v99 = vunpack.c.l.b16 %v19
    %v100 = vunpack.c.l.b16 %v20
    %v101 = vunpack.c.l.b16 %v21
    %v102 = vunpack.c.l.b16 %v22
    %v103 = vunpack.c.l.b16 %v23
    %v104 = vunpack.c.l.b16 %v24
    %v105 = vunpack.c.l.b16 %v25
    %v106 = vunpack.c.l.b16 %v26
    %v107 = vunpack.c.l.b16 %v27
    %v108 = vunpack.c.l.b16 %v28
    %v109 = vunpack.c.l.b16 %v29
    %v110 = vunpack.c.l.b16 %v30
    %v111 = vunpack.c.l.b16 %v31
    %v112 = vunpack.c.l.b16 %v32
    %v113 = vunpack.c.l.b16 %v33
    %v114 = vunpack.c.l.b16 %v34
    %v115 = vunpack.c.l.b16 %v35
    %v116 = vunpack.c.l.b16 %v36
    %v117 = vunpack.c.l.b16 %v37
    %v118 = vunpack.c.l.b16 %v38
    %v119 = vunpack.c.l.b16 %v39
    %v120 = vunpack.c.l.b16 %v40
    %v121 = vunpack.c.l.b16 %v41
    %v122 = vunpack.c.l.b16 %v42
    %v123 = vunpack.c.l.b16 %v43
    %v124 = vunpack.c.l.b16 %v44
    %v125 = vunpack.c.l.b16 %v45
    %v126 = vunpack.c.l.b16 %v46
    %v127 = vunpack.c.l.b16 %v47
    %v128 = vunpack.c.l.b16 %v48
    %v129 = vunpack.c.l.b16 %v49
    %v130 = vunpack.c.l.b16 %v50
    %v131 = vunpack.c.l.b16 %v51
    %v132 = vunpack.c.l.b16 %v52
    %v133 = vunpack.c.l.b16 %v53
    %v134 = vpack.c.b16 %v97, %v96
    %v135 = vpack.c.b16 %v99, %v98
    %v136 = vpack.c.b16 %v101, %v100
    %v137 = vpack.c.b16 %v103, %v102
    %v138 = vpack.c.b16 %v105, %v104
    %v139 = vpack.c.b16 %v107, %v106
    %v140 = vpack.c.b16 %v109, %v108
    %v141 = vpack.c.b16 %v111, %v110
    %v142 = vpack.c.b16 %v113, %v112
    %v143 = vpack.c.b16 %v115, %v114
    %v144 = vpack.c.b16 %v117, %v116
    %v145 = vpack.c.b16 %v119, %v118
    %v146 = vpack.c.b16 %v121, %v120
    %v147 = vpack.c.b16 %v123, %v122
    %v148 = vpack.c.b16 %v125, %v124
    %v149 = vpack.c.b16 %v127, %v126
    %v150 = vpack.c.b16 %v129, %v128
    %v151 = vpack.c.b16 %v131, %v130
    %v152 = vpack.c.b16 %v133, %v132
    %v155 = vunpack.c.l.b16 %v54
    %v156 = vunpack.c.l.b16 %v55
    %v157 = vpack.c.b16 %v156, %v155
    %vm159 = vcmask 130048
    %v161 = vsel %vm159, %v134, 0
    %v164 = vsel %vm159, %v135, 0
    %v167 = vsel %vm159, %v136, 0
    %v170 = vsel %vm159, %v137, 0
    %v173 = vsel %vm159, %v138, 0
    %v176 = vsel %vm159, %v139, 0
    %v179 = vsel %vm159, %v140, 0
    %v182 = vsel %vm159, %v141, 0
    %v185 = vsel %vm159, %v142, 0
    %v188 = vsel %vm159, %v143, 0
    %v191 = vsel %vm159, %v144, 0
    %v194 = vsel %vm159, %v145, 0
    %v197 = vsel %vm159, %v146, 0
    %v200 = vsel %vm159, %v147, 0
    %v203 = vsel %vm159, %v148, 0
    %v206 = vsel %vm159, %v149, 0
    %v209 = vsel %vm159, %v150, 0
    %v212 = vsel %vm159, %v151, 0
    %v215 = vsel %vm159, %v152, 0
    %217 = vmatpush.bf16.msra.mxu0 0
    %218 = vmatpush.bf16.msra.mxu0 0
    %219 = vmatpush.bf16.msra.mxu0 0
    %220 = vmatpush.bf16.msra.mxu0 0
    %221 = vmatpush.bf16.msra.mxu0 0
    %222 = vmatpush.bf16.msra.mxu0 0
    %223 = vmatpush.bf16.msra.mxu0 0
    %224 = vmatpush.bf16.msra.mxu0 %v157
    %225 = vmatmul.bf16.gmra.mxu0 %v161
    %v226 = vpop.f32.mrf.mxu0
    %v227 = vadd.f32 %v57, %v226
    %v228 = vpop.f32.mrf.mxu0
    %v229 = vadd.f32 %v57, %v228
    %230 = vmatmul.bf16.gmra.mxu0 %v164
    %v231 = vpop.f32.mrf.mxu0
    %v232 = vadd.f32 %v57, %v231
    %v233 = vpop.f32.mrf.mxu0
    %v234 = vadd.f32 %v57, %v233
    %235 = vmatmul.bf16.gmra.mxu0 %v167
    %v236 = vpop.f32.mrf.mxu0
    %v237 = vadd.f32 %v57, %v236
    %v238 = vpop.f32.mrf.mxu0
    %v239 = vadd.f32 %v57, %v238
    %240 = vmatmul.bf16.gmra.mxu0 %v170
    %v241 = vpop.f32.mrf.mxu0
    %v242 = vadd.f32 %v57, %v241
    %v243 = vpop.f32.mrf.mxu0
    %v244 = vadd.f32 %v57, %v243
    %245 = vmatmul.bf16.gmra.mxu0 %v173
    %v246 = vpop.f32.mrf.mxu0
    %v247 = vadd.f32 %v57, %v246
    %v248 = vpop.f32.mrf.mxu0
    %v249 = vadd.f32 %v57, %v248
    %250 = vmatmul.bf16.gmra.mxu0 %v176
    %v251 = vpop.f32.mrf.mxu0
    %v252 = vadd.f32 %v57, %v251
    %v253 = vpop.f32.mrf.mxu0
    %v254 = vadd.f32 %v57, %v253
    %255 = vmatmul.bf16.gmra.mxu0 %v179
    %v256 = vpop.f32.mrf.mxu0
    %v257 = vadd.f32 %v57, %v256
    %v258 = vpop.f32.mrf.mxu0
    %v259 = vadd.f32 %v57, %v258
    %260 = vmatmul.bf16.gmra.mxu0 %v182
    %v261 = vpop.f32.mrf.mxu0
    %v262 = vadd.f32 %v57, %v261
    %v263 = vpop.f32.mrf.mxu0
    %v264 = vadd.f32 %v57, %v263
    %265 = vmatmul.bf16.gmra.mxu0 %v185
    %v266 = vpop.f32.mrf.mxu0
    %v267 = vadd.f32 %v57, %v266
    %v268 = vpop.f32.mrf.mxu0
    %v269 = vadd.f32 %v57, %v268
    %270 = vmatmul.bf16.gmra.mxu0 %v188
    %v271 = vpop.f32.mrf.mxu0
    %v272 = vadd.f32 %v57, %v271
    %v273 = vpop.f32.mrf.mxu0
    %v274 = vadd.f32 %v57, %v273
    %275 = vmatmul.bf16.gmra.mxu0 %v191
    %v276 = vpop.f32.mrf.mxu0
    %v277 = vadd.f32 %v57, %v276
    %v278 = vpop.f32.mrf.mxu0
    %v279 = vadd.f32 %v57, %v278
    %280 = vmatmul.bf16.gmra.mxu0 %v194
    %v281 = vpop.f32.mrf.mxu0
    %v282 = vadd.f32 %v57, %v281
    %v283 = vpop.f32.mrf.mxu0
    %v284 = vadd.f32 %v57, %v283
    %285 = vmatmul.bf16.gmra.mxu0 %v197
    %v286 = vpop.f32.mrf.mxu0
    %v287 = vadd.f32 %v57, %v286
    %v288 = vpop.f32.mrf.mxu0
    %v289 = vadd.f32 %v57, %v288
    %290 = vmatmul.bf16.gmra.mxu0 %v200
    %v291 = vpop.f32.mrf.mxu0
    %v292 = vadd.f32 %v57, %v291
    %v293 = vpop.f32.mrf.mxu0
    %v294 = vadd.f32 %v57, %v293
    %295 = vmatmul.bf16.gmra.mxu0 %v203
    %v296 = vpop.f32.mrf.mxu0
    %v297 = vadd.f32 %v57, %v296
    %v298 = vpop.f32.mrf.mxu0
    %v299 = vadd.f32 %v57, %v298
    %300 = vmatmul.bf16.gmra.mxu0 %v206
    %v301 = vpop.f32.mrf.mxu0
    %v302 = vadd.f32 %v57, %v301
    %v303 = vpop.f32.mrf.mxu0
    %v304 = vadd.f32 %v57, %v303
    %305 = vmatmul.bf16.gmra.mxu0 %v209
    %v306 = vpop.f32.mrf.mxu0
    %v307 = vadd.f32 %v57, %v306
    %v308 = vpop.f32.mrf.mxu0
    %v309 = vadd.f32 %v57, %v308
    %310 = vmatmul.bf16.gmra.mxu0 %v212
    %v311 = vpop.f32.mrf.mxu0
    %v312 = vadd.f32 %v57, %v311
    %v313 = vpop.f32.mrf.mxu0
    %v314 = vadd.f32 %v57, %v313
    %315 = vmatmul.bf16.gmra.mxu0 %v215
    %v316 = vpop.f32.mrf.mxu0
    %v317 = vadd.f32 %v57, %v316
    %v318 = vpop.f32.mrf.mxu0
    %v319 = vadd.f32 %v57, %v318
    %320 = vdwg.mxu0
    %v321 = vld [vmem:[%s2 + $0x1] sm:$0x1]
    %v322 = vld [vmem:[%s2 + $0x2] sm:$0x1]
    %vm323 = vcmask 523264
    %v324 = vsel %vm323, %v227, 0.0
    %325 = vadd.xlane.f32.xlu0 %v324
    %v326 = vpop.xlane.xlu0 %325
    %v327 = vsel %vm323, %v229, 0.0
    %328 = vadd.xlane.f32.xlu0 %v327
    %v329 = vpop.xlane.xlu0 %328
    %v330 = vsel %vm323, %v232, 0.0
    %331 = vadd.xlane.f32.xlu0 %v330
    %v332 = vpop.xlane.xlu0 %331
    %v333 = vsel %vm323, %v234, 0.0
    %334 = vadd.xlane.f32.xlu0 %v333
    %v335 = vpop.xlane.xlu0 %334
    %v336 = vsel %vm323, %v237, 0.0
    %337 = vadd.xlane.f32.xlu0 %v336
    %v338 = vpop.xlane.xlu0 %337
    %v339 = vsel %vm323, %v239, 0.0
    %340 = vadd.xlane.f32.xlu0 %v339
    %v341 = vpop.xlane.xlu0 %340
    %v342 = vsel %vm323, %v242, 0.0
    %343 = vadd.xlane.f32.xlu0 %v342
    %v344 = vpop.xlane.xlu0 %343
    %v345 = vsel %vm323, %v244, 0.0
    %346 = vadd.xlane.f32.xlu0 %v345
    %v347 = vpop.xlane.xlu0 %346
    %v348 = vsel %vm323, %v247, 0.0
    %349 = vadd.xlane.f32.xlu0 %v348
    %v350 = vpop.xlane.xlu0 %349
    %v351 = vsel %vm323, %v249, 0.0
    %352 = vadd.xlane.f32.xlu0 %v351
    %v353 = vpop.xlane.xlu0 %352
    %v354 = vsel %vm323, %v252, 0.0
    %355 = vadd.xlane.f32.xlu0 %v354
    %v356 = vpop.xlane.xlu0 %355
    %v357 = vsel %vm323, %v254, 0.0
    %358 = vadd.xlane.f32.xlu0 %v357
    %v359 = vpop.xlane.xlu0 %358
    %v360 = vsel %vm323, %v257, 0.0
    %361 = vadd.xlane.f32.xlu0 %v360
    %v362 = vpop.xlane.xlu0 %361
    %v363 = vsel %vm323, %v259, 0.0
    %364 = vadd.xlane.f32.xlu0 %v363
    %v365 = vpop.xlane.xlu0 %364
    %v366 = vsel %vm323, %v262, 0.0
    %367 = vadd.xlane.f32.xlu0 %v366
    %v368 = vpop.xlane.xlu0 %367
    %v369 = vsel %vm323, %v264, 0.0
    %370 = vadd.xlane.f32.xlu0 %v369
    %v371 = vpop.xlane.xlu0 %370
    %v372 = vsel %vm323, %v267, 0.0
    %373 = vadd.xlane.f32.xlu0 %v372
    %v374 = vpop.xlane.xlu0 %373
    %v375 = vsel %vm323, %v269, 0.0
    %376 = vadd.xlane.f32.xlu0 %v375
    %v377 = vpop.xlane.xlu0 %376
    %v378 = vsel %vm323, %v272, 0.0
    %379 = vadd.xlane.f32.xlu0 %v378
    %v380 = vpop.xlane.xlu0 %379
    %v381 = vsel %vm323, %v274, 0.0
    %382 = vadd.xlane.f32.xlu0 %v381
    %v383 = vpop.xlane.xlu0 %382
    %v384 = vsel %vm323, %v277, 0.0
    %385 = vadd.xlane.f32.xlu0 %v384
    %v386 = vpop.xlane.xlu0 %385
    %v387 = vsel %vm323, %v279, 0.0
    %388 = vadd.xlane.f32.xlu0 %v387
    %v389 = vpop.xlane.xlu0 %388
    %v390 = vsel %vm323, %v282, 0.0
    %391 = vadd.xlane.f32.xlu0 %v390
    %v392 = vpop.xlane.xlu0 %391
    %v393 = vsel %vm323, %v284, 0.0
    %394 = vadd.xlane.f32.xlu0 %v393
    %v395 = vpop.xlane.xlu0 %394
    %v396 = vsel %vm323, %v287, 0.0
    %397 = vadd.xlane.f32.xlu0 %v396
    %v398 = vpop.xlane.xlu0 %397
    %v399 = vsel %vm323, %v289, 0.0
    %400 = vadd.xlane.f32.xlu0 %v399
    %v401 = vpop.xlane.xlu0 %400
    %v402 = vsel %vm323, %v292, 0.0
    %403 = vadd.xlane.f32.xlu0 %v402
    %v404 = vpop.xlane.xlu0 %403
    %v405 = vsel %vm323, %v294, 0.0
    %406 = vadd.xlane.f32.xlu0 %v405
    %v407 = vpop.xlane.xlu0 %406
    %v408 = vsel %vm323, %v297, 0.0
    %409 = vadd.xlane.f32.xlu0 %v408
    %v410 = vpop.xlane.xlu0 %409
    %v411 = vsel %vm323, %v299, 0.0
    %412 = vadd.xlane.f32.xlu0 %v411
    %v413 = vpop.xlane.xlu0 %412
    %v414 = vsel %vm323, %v302, 0.0
    %415 = vadd.xlane.f32.xlu0 %v414
    %v416 = vpop.xlane.xlu0 %415
    %v417 = vsel %vm323, %v304, 0.0
    %418 = vadd.xlane.f32.xlu0 %v417
    %v419 = vpop.xlane.xlu0 %418
    %v420 = vsel %vm323, %v307, 0.0
    %421 = vadd.xlane.f32.xlu0 %v420
    %v422 = vpop.xlane.xlu0 %421
    %v423 = vsel %vm323, %v309, 0.0
    %424 = vadd.xlane.f32.xlu0 %v423
    %v425 = vpop.xlane.xlu0 %424
    %v426 = vsel %vm323, %v312, 0.0
    %427 = vadd.xlane.f32.xlu0 %v426
    %v428 = vpop.xlane.xlu0 %427
    %v429 = vsel %vm323, %v314, 0.0
    %430 = vadd.xlane.f32.xlu0 %v429
    %v431 = vpop.xlane.xlu0 %430
    %v432 = vsel %vm323, %v317, 0.0
    %433 = vadd.xlane.f32.xlu0 %v432
    %v434 = vpop.xlane.xlu0 %433
    %v435 = vsel %vm323, %v319, 0.0
    %436 = vadd.xlane.f32.xlu0 %v435
    %v437 = vpop.xlane.xlu0 %436
    %v438 = vrcp.pop 64.0
    %v439 = vmul.f32 64.0, %v438
    %v440 = vsub.f32 1.0, %v439
    %v441 = vmul.f32 %v438, %v440
    %v442 = vadd.f32 %v438, %v441
    %vm443 = vweird.f32 %v438
    %v444 = vsel %vm443, %v438, %v442
    %v445 = vmul.f32 %v326, %v444
    %v446 = vmul.f32 %v329, %v444
    %v447 = vmul.f32 %v332, %v444
    %v448 = vmul.f32 %v335, %v444
    %v449 = vmul.f32 %v338, %v444
    %v450 = vmul.f32 %v341, %v444
    %v451 = vmul.f32 %v344, %v444
    %v452 = vmul.f32 %v347, %v444
    %v453 = vmul.f32 %v350, %v444
    %v454 = vmul.f32 %v353, %v444
    %v455 = vmul.f32 %v356, %v444
    %v456 = vmul.f32 %v359, %v444
    %v457 = vmul.f32 %v362, %v444
    %v458 = vmul.f32 %v365, %v444
    %v459 = vmul.f32 %v368, %v444
    %v460 = vmul.f32 %v371, %v444
    %v461 = vmul.f32 %v374, %v444
    %v462 = vmul.f32 %v377, %v444
    %v463 = vmul.f32 %v380, %v444
    %v464 = vmul.f32 %v383, %v444
    %v465 = vmul.f32 %v386, %v444
    %v466 = vmul.f32 %v389, %v444
    %v467 = vmul.f32 %v392, %v444
    %v468 = vmul.f32 %v395, %v444
    %v469 = vmul.f32 %v398, %v444
    %v470 = vmul.f32 %v401, %v444
    %v471 = vmul.f32 %v404, %v444
    %v472 = vmul.f32 %v407, %v444
    %v473 = vmul.f32 %v410, %v444
    %v474 = vmul.f32 %v413, %v444
    %v475 = vmul.f32 %v416, %v444
    %v476 = vmul.f32 %v419, %v444
    %v477 = vmul.f32 %v422, %v444
    %v478 = vmul.f32 %v425, %v444
    %v479 = vmul.f32 %v428, %v444
    %v480 = vmul.f32 %v431, %v444
    %v481 = vmul.f32 %v434, %v444
    %v482 = vmul.f32 %v437, %v444
    %v483 = vmul.f32 %v227, %v227
    %v484 = vmul.f32 %v229, %v229
    %v485 = vmul.f32 %v232, %v232
    %v486 = vmul.f32 %v234, %v234
    %v487 = vmul.f32 %v237, %v237
    %v488 = vmul.f32 %v239, %v239
    %v489 = vmul.f32 %v242, %v242
    %v490 = vmul.f32 %v244, %v244
    %v491 = vmul.f32 %v247, %v247
    %v492 = vmul.f32 %v249, %v249
    %v493 = vmul.f32 %v252, %v252
    %v494 = vmul.f32 %v254, %v254
    %v495 = vmul.f32 %v257, %v257
    %v496 = vmul.f32 %v259, %v259
    %v497 = vmul.f32 %v262, %v262
    %v498 = vmul.f32 %v264, %v264
    %v499 = vmul.f32 %v267, %v267
    %v500 = vmul.f32 %v269, %v269
    %v501 = vmul.f32 %v272, %v272
    %v502 = vmul.f32 %v274, %v274
    %v503 = vmul.f32 %v277, %v277
    %v504 = vmul.f32 %v279, %v279
    %v505 = vmul.f32 %v282, %v282
    %v506 = vmul.f32 %v284, %v284
    %v507 = vmul.f32 %v287, %v287
    %v508 = vmul.f32 %v289, %v289
    %v509 = vmul.f32 %v292, %v292
    %v510 = vmul.f32 %v294, %v294
    %v511 = vmul.f32 %v297, %v297
    %v512 = vmul.f32 %v299, %v299
    %v513 = vmul.f32 %v302, %v302
    %v514 = vmul.f32 %v304, %v304
    %v515 = vmul.f32 %v307, %v307
    %v516 = vmul.f32 %v309, %v309
    %v517 = vmul.f32 %v312, %v312
    %v518 = vmul.f32 %v314, %v314
    %v519 = vmul.f32 %v317, %v317
    %v520 = vmul.f32 %v319, %v319
    %v521 = vsel %vm323, %v483, 0.0
    %522 = vadd.xlane.f32.xlu0 %v521
    %v523 = vpop.xlane.xlu0 %522
    %v524 = vsel %vm323, %v484, 0.0
    %525 = vadd.xlane.f32.xlu0 %v524
    %v526 = vpop.xlane.xlu0 %525
    %v527 = vsel %vm323, %v485, 0.0
    %528 = vadd.xlane.f32.xlu0 %v527
    %v529 = vpop.xlane.xlu0 %528
    %v530 = vsel %vm323, %v486, 0.0
    %531 = vadd.xlane.f32.xlu0 %v530
    %v532 = vpop.xlane.xlu0 %531
    %v533 = vsel %vm323, %v487, 0.0
    %534 = vadd.xlane.f32.xlu0 %v533
    %v535 = vpop.xlane.xlu0 %534
    %v536 = vsel %vm323, %v488, 0.0
    %537 = vadd.xlane.f32.xlu0 %v536
    %v538 = vpop.xlane.xlu0 %537
    %v539 = vsel %vm323, %v489, 0.0
    %540 = vadd.xlane.f32.xlu0 %v539
    %v541 = vpop.xlane.xlu0 %540
    %v542 = vsel %vm323, %v490, 0.0
    %543 = vadd.xlane.f32.xlu0 %v542
    %v544 = vpop.xlane.xlu0 %543
    %v545 = vsel %vm323, %v491, 0.0
    %546 = vadd.xlane.f32.xlu0 %v545
    %v547 = vpop.xlane.xlu0 %546
    %v548 = vsel %vm323, %v492, 0.0
    %549 = vadd.xlane.f32.xlu0 %v548
    %v550 = vpop.xlane.xlu0 %549
    %v551 = vsel %vm323, %v493, 0.0
    %552 = vadd.xlane.f32.xlu0 %v551
    %v553 = vpop.xlane.xlu0 %552
    %v554 = vsel %vm323, %v494, 0.0
    %555 = vadd.xlane.f32.xlu0 %v554
    %v556 = vpop.xlane.xlu0 %555
    %v557 = vsel %vm323, %v495, 0.0
    %558 = vadd.xlane.f32.xlu0 %v557
    %v559 = vpop.xlane.xlu0 %558
    %v560 = vsel %vm323, %v496, 0.0
    %561 = vadd.xlane.f32.xlu0 %v560
    %v562 = vpop.xlane.xlu0 %561
    %v563 = vsel %vm323, %v497, 0.0
    %564 = vadd.xlane.f32.xlu0 %v563
    %v565 = vpop.xlane.xlu0 %564
    %v566 = vsel %vm323, %v498, 0.0
    %567 = vadd.xlane.f32.xlu0 %v566
    %v568 = vpop.xlane.xlu0 %567
    %v569 = vsel %vm323, %v499, 0.0
    %570 = vadd.xlane.f32.xlu0 %v569
    %v571 = vpop.xlane.xlu0 %570
    %v572 = vsel %vm323, %v500, 0.0
    %573 = vadd.xlane.f32.xlu0 %v572
    %v574 = vpop.xlane.xlu0 %573
    %v575 = vsel %vm323, %v501, 0.0
    %576 = vadd.xlane.f32.xlu0 %v575
    %v577 = vpop.xlane.xlu0 %576
    %v578 = vsel %vm323, %v502, 0.0
    %579 = vadd.xlane.f32.xlu0 %v578
    %v580 = vpop.xlane.xlu0 %579
    %v581 = vsel %vm323, %v503, 0.0
    %582 = vadd.xlane.f32.xlu0 %v581
    %v583 = vpop.xlane.xlu0 %582
    %v584 = vsel %vm323, %v504, 0.0
    %585 = vadd.xlane.f32.xlu0 %v584
    %v586 = vpop.xlane.xlu0 %585
    %v587 = vsel %vm323, %v505, 0.0
    %588 = vadd.xlane.f32.xlu0 %v587
    %v589 = vpop.xlane.xlu0 %588
    %v590 = vsel %vm323, %v506, 0.0
    %591 = vadd.xlane.f32.xlu0 %v590
    %v592 = vpop.xlane.xlu0 %591
    %v593 = vsel %vm323, %v507, 0.0
    %594 = vadd.xlane.f32.xlu0 %v593
    %v595 = vpop.xlane.xlu0 %594
    %v596 = vsel %vm323, %v508, 0.0
    %597 = vadd.xlane.f32.xlu0 %v596
    %v598 = vpop.xlane.xlu0 %597
    %v599 = vsel %vm323, %v509, 0.0
    %600 = vadd.xlane.f32.xlu0 %v599
    %v601 = vpop.xlane.xlu0 %600
    %v602 = vsel %vm323, %v510, 0.0
    %603 = vadd.xlane.f32.xlu0 %v602
    %v604 = vpop.xlane.xlu0 %603
    %v605 = vsel %vm323, %v511, 0.0
    %606 = vadd.xlane.f32.xlu0 %v605
    %v607 = vpop.xlane.xlu0 %606
    %v608 = vsel %vm323, %v512, 0.0
    %609 = vadd.xlane.f32.xlu0 %v608
    %v610 = vpop.xlane.xlu0 %609
    %v611 = vsel %vm323, %v513, 0.0
    %612 = vadd.xlane.f32.xlu0 %v611
    %v613 = vpop.xlane.xlu0 %612
    %v614 = vsel %vm323, %v514, 0.0
    %615 = vadd.xlane.f32.xlu0 %v614
    %v616 = vpop.xlane.xlu0 %615
    %v617 = vsel %vm323, %v515, 0.0
    %618 = vadd.xlane.f32.xlu0 %v617
    %v619 = vpop.xlane.xlu0 %618
    %v620 = vsel %vm323, %v516, 0.0
    %621 = vadd.xlane.f32.xlu0 %v620
    %v622 = vpop.xlane.xlu0 %621
    %v623 = vsel %vm323, %v517, 0.0
    %624 = vadd.xlane.f32.xlu0 %v623
    %v625 = vpop.xlane.xlu0 %624
    %v626 = vsel %vm323, %v518, 0.0
    %627 = vadd.xlane.f32.xlu0 %v626
    %v628 = vpop.xlane.xlu0 %627
    %v629 = vsel %vm323, %v519, 0.0
    %630 = vadd.xlane.f32.xlu0 %v629
    %v631 = vpop.xlane.xlu0 %630
    %v632 = vsel %vm323, %v520, 0.0
    %633 = vadd.xlane.f32.xlu0 %v632
    %v634 = vpop.xlane.xlu0 %633
    %v635 = vmul.f32 %v523, %v444
    %v636 = vmul.f32 %v526, %v444
    %v637 = vmul.f32 %v529, %v444
    %v638 = vmul.f32 %v532, %v444
    %v639 = vmul.f32 %v535, %v444
    %v640 = vmul.f32 %v538, %v444
    %v641 = vmul.f32 %v541, %v444
    %v642 = vmul.f32 %v544, %v444
    %v643 = vmul.f32 %v547, %v444
    %v644 = vmul.f32 %v550, %v444
    %v645 = vmul.f32 %v553, %v444
    %v646 = vmul.f32 %v556, %v444
    %v647 = vmul.f32 %v559, %v444
    %v648 = vmul.f32 %v562, %v444
    %v649 = vmul.f32 %v565, %v444
    %v650 = vmul.f32 %v568, %v444
    %v651 = vmul.f32 %v571, %v444
    %v652 = vmul.f32 %v574, %v444
    %v653 = vmul.f32 %v577, %v444
    %v654 = vmul.f32 %v580, %v444
    %v655 = vmul.f32 %v583, %v444
    %v656 = vmul.f32 %v586, %v444
    %v657 = vmul.f32 %v589, %v444
    %v658 = vmul.f32 %v592, %v444
    %v659 = vmul.f32 %v595, %v444
    %v660 = vmul.f32 %v598, %v444
    %v661 = vmul.f32 %v601, %v444
    %v662 = vmul.f32 %v604, %v444
    %v663 = vmul.f32 %v607, %v444
    %v664 = vmul.f32 %v610, %v444
    %v665 = vmul.f32 %v613, %v444
    %v666 = vmul.f32 %v616, %v444
    %v667 = vmul.f32 %v619, %v444
    %v668 = vmul.f32 %v622, %v444
    %v669 = vmul.f32 %v625, %v444
    %v670 = vmul.f32 %v628, %v444
    %v671 = vmul.f32 %v631, %v444
    %v672 = vmul.f32 %v634, %v444
    %v673 = vmul.f32 %v445, %v445
    %v674 = vmul.f32 %v446, %v446
    %v675 = vmul.f32 %v447, %v447
    %v676 = vmul.f32 %v448, %v448
    %v677 = vmul.f32 %v449, %v449
    %v678 = vmul.f32 %v450, %v450
    %v679 = vmul.f32 %v451, %v451
    %v680 = vmul.f32 %v452, %v452
    %v681 = vmul.f32 %v453, %v453
    %v682 = vmul.f32 %v454, %v454
    %v683 = vmul.f32 %v455, %v455
    %v684 = vmul.f32 %v456, %v456
    %v685 = vmul.f32 %v457, %v457
    %v686 = vmul.f32 %v458, %v458
    %v687 = vmul.f32 %v459, %v459
    %v688 = vmul.f32 %v460, %v460
    %v689 = vmul.f32 %v461, %v461
    %v690 = vmul.f32 %v462, %v462
    %v691 = vmul.f32 %v463, %v463
    %v692 = vmul.f32 %v464, %v464
    %v693 = vmul.f32 %v465, %v465
    %v694 = vmul.f32 %v466, %v466
    %v695 = vmul.f32 %v467, %v467
    %v696 = vmul.f32 %v468, %v468
    %v697 = vmul.f32 %v469, %v469
    %v698 = vmul.f32 %v470, %v470
    %v699 = vmul.f32 %v471, %v471
    %v700 = vmul.f32 %v472, %v472
    %v701 = vmul.f32 %v473, %v473
    %v702 = vmul.f32 %v474, %v474
    %v703 = vmul.f32 %v475, %v475
    %v704 = vmul.f32 %v476, %v476
    %v705 = vmul.f32 %v477, %v477
    %v706 = vmul.f32 %v478, %v478
    %v707 = vmul.f32 %v479, %v479
    %v708 = vmul.f32 %v480, %v480
    %v709 = vmul.f32 %v481, %v481
    %v710 = vmul.f32 %v482, %v482
    %v711 = vsub.f32 %v635, %v673
    %v712 = vsub.f32 %v636, %v674
    %v713 = vsub.f32 %v637, %v675
    %v714 = vsub.f32 %v638, %v676
    %v715 = vsub.f32 %v639, %v677
    %v716 = vsub.f32 %v640, %v678
    %v717 = vsub.f32 %v641, %v679
    %v718 = vsub.f32 %v642, %v680
    %v719 = vsub.f32 %v643, %v681
    %v720 = vsub.f32 %v644, %v682
    %v721 = vsub.f32 %v645, %v683
    %v722 = vsub.f32 %v646, %v684
    %v723 = vsub.f32 %v647, %v685
    %v724 = vsub.f32 %v648, %v686
    %v725 = vsub.f32 %v649, %v687
    %v726 = vsub.f32 %v650, %v688
    %v727 = vsub.f32 %v651, %v689
    %v728 = vsub.f32 %v652, %v690
    %v729 = vsub.f32 %v653, %v691
    %v730 = vsub.f32 %v654, %v692
    %v731 = vsub.f32 %v655, %v693
    %v732 = vsub.f32 %v656, %v694
    %v733 = vsub.f32 %v657, %v695
    %v734 = vsub.f32 %v658, %v696
    %v735 = vsub.f32 %v659, %v697
    %v736 = vsub.f32 %v660, %v698
    %v737 = vsub.f32 %v661, %v699
    %v738 = vsub.f32 %v662, %v700
    %v739 = vsub.f32 %v663, %v701
    %v740 = vsub.f32 %v664, %v702
    %v741 = vsub.f32 %v665, %v703
    %v742 = vsub.f32 %v666, %v704
    %v743 = vsub.f32 %v667, %v705
    %v744 = vsub.f32 %v668, %v706
    %v745 = vsub.f32 %v669, %v707
    %v746 = vsub.f32 %v670, %v708
    %v747 = vsub.f32 %v671, %v709
    %v748 = vsub.f32 %v672, %v710
    %v749 = vmax.f32 %v711, 0.0
    %v750 = vmax.f32 %v712, 0.0
    %v751 = vmax.f32 %v713, 0.0
    %v752 = vmax.f32 %v714, 0.0
    %v753 = vmax.f32 %v715, 0.0
    %v754 = vmax.f32 %v716, 0.0
    %v755 = vmax.f32 %v717, 0.0
    %v756 = vmax.f32 %v718, 0.0
    %v757 = vmax.f32 %v719, 0.0
    %v758 = vmax.f32 %v720, 0.0
    %v759 = vmax.f32 %v721, 0.0
    %v760 = vmax.f32 %v722, 0.0
    %v761 = vmax.f32 %v723, 0.0
    %v762 = vmax.f32 %v724, 0.0
    %v763 = vmax.f32 %v725, 0.0
    %v764 = vmax.f32 %v726, 0.0
    %v765 = vmax.f32 %v727, 0.0
    %v766 = vmax.f32 %v728, 0.0
    %v767 = vmax.f32 %v729, 0.0
    %v768 = vmax.f32 %v730, 0.0
    %v769 = vmax.f32 %v731, 0.0
    %v770 = vmax.f32 %v732, 0.0
    %v771 = vmax.f32 %v733, 0.0
    %v772 = vmax.f32 %v734, 0.0
    %v773 = vmax.f32 %v735, 0.0
    %v774 = vmax.f32 %v736, 0.0
    %v775 = vmax.f32 %v737, 0.0
    %v776 = vmax.f32 %v738, 0.0
    %v777 = vmax.f32 %v739, 0.0
    %v778 = vmax.f32 %v740, 0.0
    %v779 = vmax.f32 %v741, 0.0
    %v780 = vmax.f32 %v742, 0.0
    %v781 = vmax.f32 %v743, 0.0
    %v782 = vmax.f32 %v744, 0.0
    %v783 = vmax.f32 %v745, 0.0
    %v784 = vmax.f32 %v746, 0.0
    %v785 = vmax.f32 %v747, 0.0
    %v786 = vmax.f32 %v748, 0.0
    %v787 = vsub.f32 %v227, %v445
    %v788 = vsub.f32 %v229, %v446
    %v789 = vsub.f32 %v232, %v447
    %v790 = vsub.f32 %v234, %v448
    %v791 = vsub.f32 %v237, %v449
    %v792 = vsub.f32 %v239, %v450
    %v793 = vsub.f32 %v242, %v451
    %v794 = vsub.f32 %v244, %v452
    %v795 = vsub.f32 %v247, %v453
    %v796 = vsub.f32 %v249, %v454
    %v797 = vsub.f32 %v252, %v455
    %v798 = vsub.f32 %v254, %v456
    %v799 = vsub.f32 %v257, %v457
    %v800 = vsub.f32 %v259, %v458
    %v801 = vsub.f32 %v262, %v459
    %v802 = vsub.f32 %v264, %v460
    %v803 = vsub.f32 %v267, %v461
    %v804 = vsub.f32 %v269, %v462
    %v805 = vsub.f32 %v272, %v463
    %v806 = vsub.f32 %v274, %v464
    %v807 = vsub.f32 %v277, %v465
    %v808 = vsub.f32 %v279, %v466
    %v809 = vsub.f32 %v282, %v467
    %v810 = vsub.f32 %v284, %v468
    %v811 = vsub.f32 %v287, %v469
    %v812 = vsub.f32 %v289, %v470
    %v813 = vsub.f32 %v292, %v471
    %v814 = vsub.f32 %v294, %v472
    %v815 = vsub.f32 %v297, %v473
    %v816 = vsub.f32 %v299, %v474
    %v817 = vsub.f32 %v302, %v475
    %v818 = vsub.f32 %v304, %v476
    %v819 = vsub.f32 %v307, %v477
    %v820 = vsub.f32 %v309, %v478
    %v821 = vsub.f32 %v312, %v479
    %v822 = vsub.f32 %v314, %v480
    %v823 = vsub.f32 %v317, %v481
    %v824 = vsub.f32 %v319, %v482
    %v825 = vadd.f32 %v749, 1e-05
    %v826 = vadd.f32 %v750, 1e-05
    %v827 = vadd.f32 %v751, 1e-05
    %v828 = vadd.f32 %v752, 1e-05
    %v829 = vadd.f32 %v753, 1e-05
    %v830 = vadd.f32 %v754, 1e-05
    %v831 = vadd.f32 %v755, 1e-05
    %v832 = vadd.f32 %v756, 1e-05
    %v833 = vadd.f32 %v757, 1e-05
    %v834 = vadd.f32 %v758, 1e-05
    %v835 = vadd.f32 %v759, 1e-05
    %v836 = vadd.f32 %v760, 1e-05
    %v837 = vadd.f32 %v761, 1e-05
    %v838 = vadd.f32 %v762, 1e-05
    %v839 = vadd.f32 %v763, 1e-05
    %v840 = vadd.f32 %v764, 1e-05
    %v841 = vadd.f32 %v765, 1e-05
    %v842 = vadd.f32 %v766, 1e-05
    %v843 = vadd.f32 %v767, 1e-05
    %v844 = vadd.f32 %v768, 1e-05
    %v845 = vadd.f32 %v769, 1e-05
    %v846 = vadd.f32 %v770, 1e-05
    %v847 = vadd.f32 %v771, 1e-05
    %v848 = vadd.f32 %v772, 1e-05
    %v849 = vadd.f32 %v773, 1e-05
    %v850 = vadd.f32 %v774, 1e-05
    %v851 = vadd.f32 %v775, 1e-05
    %v852 = vadd.f32 %v776, 1e-05
    %v853 = vadd.f32 %v777, 1e-05
    %v854 = vadd.f32 %v778, 1e-05
    %v855 = vadd.f32 %v779, 1e-05
    %v856 = vadd.f32 %v780, 1e-05
    %v857 = vadd.f32 %v781, 1e-05
    %v858 = vadd.f32 %v782, 1e-05
    %v859 = vadd.f32 %v783, 1e-05
    %v860 = vadd.f32 %v784, 1e-05
    %v861 = vadd.f32 %v785, 1e-05
    %v862 = vadd.f32 %v786, 1e-05
    %v863 = vrsqrt.pop %v825
    %v864 = vmul.f32 %v863, %v825
    %v865 = vmul.f32 %v864, %v863
    %v866 = vmul.f32 0.5, %v865
    %v867 = vsub.f32 1.5, %v866
    %v868 = vmul.f32 %v863, %v867
    %vm869 = vweird.f32 %v825
    %vm870 = vweird.f32 %v863
    %vm871 = vmor %vm869, %vm870
    %v872 = vsel %vm871, %v863, %v868
    %v873 = vrsqrt.pop %v826
    %v874 = vmul.f32 %v873, %v826
    %v875 = vmul.f32 %v874, %v873
    %v876 = vmul.f32 0.5, %v875
    %v877 = vsub.f32 1.5, %v876
    %v878 = vmul.f32 %v873, %v877
    %vm879 = vweird.f32 %v826
    %vm880 = vweird.f32 %v873
    %vm881 = vmor %vm879, %vm880
    %v882 = vsel %vm881, %v873, %v878
    %v883 = vrsqrt.pop %v827
    %v884 = vmul.f32 %v883, %v827
    %v885 = vmul.f32 %v884, %v883
    %v886 = vmul.f32 0.5, %v885
    %v887 = vsub.f32 1.5, %v886
    %v888 = vmul.f32 %v883, %v887
    %vm889 = vweird.f32 %v827
    %vm890 = vweird.f32 %v883
    %vm891 = vmor %vm889, %vm890
    %v892 = vsel %vm891, %v883, %v888
    %v893 = vrsqrt.pop %v828
    %v894 = vmul.f32 %v893, %v828
    %v895 = vmul.f32 %v894, %v893
    %v896 = vmul.f32 0.5, %v895
    %v897 = vsub.f32 1.5, %v896
    %v898 = vmul.f32 %v893, %v897
    %vm899 = vweird.f32 %v828
    %vm900 = vweird.f32 %v893
    %vm901 = vmor %vm899, %vm900
    %v902 = vsel %vm901, %v893, %v898
    %v903 = vrsqrt.pop %v829
    %v904 = vmul.f32 %v903, %v829
    %v905 = vmul.f32 %v904, %v903
    %v906 = vmul.f32 0.5, %v905
    %v907 = vsub.f32 1.5, %v906
    %v908 = vmul.f32 %v903, %v907
    %vm909 = vweird.f32 %v829
    %vm910 = vweird.f32 %v903
    %vm911 = vmor %vm909, %vm910
    %v912 = vsel %vm911, %v903, %v908
    %v913 = vrsqrt.pop %v830
    %v914 = vmul.f32 %v913, %v830
    %v915 = vmul.f32 %v914, %v913
    %v916 = vmul.f32 0.5, %v915
    %v917 = vsub.f32 1.5, %v916
    %v918 = vmul.f32 %v913, %v917
    %vm919 = vweird.f32 %v830
    %vm920 = vweird.f32 %v913
    %vm921 = vmor %vm919, %vm920
    %v922 = vsel %vm921, %v913, %v918
    %v923 = vrsqrt.pop %v831
    %v924 = vmul.f32 %v923, %v831
    %v925 = vmul.f32 %v924, %v923
    %v926 = vmul.f32 0.5, %v925
    %v927 = vsub.f32 1.5, %v926
    %v928 = vmul.f32 %v923, %v927
    %vm929 = vweird.f32 %v831
    %vm930 = vweird.f32 %v923
    %vm931 = vmor %vm929, %vm930
    %v932 = vsel %vm931, %v923, %v928
    %v933 = vrsqrt.pop %v832
    %v934 = vmul.f32 %v933, %v832
    %v935 = vmul.f32 %v934, %v933
    %v936 = vmul.f32 0.5, %v935
    %v937 = vsub.f32 1.5, %v936
    %v938 = vmul.f32 %v933, %v937
    %vm939 = vweird.f32 %v832
    %vm940 = vweird.f32 %v933
    %vm941 = vmor %vm939, %vm940
    %v942 = vsel %vm941, %v933, %v938
    %v943 = vrsqrt.pop %v833
    %v944 = vmul.f32 %v943, %v833
    %v945 = vmul.f32 %v944, %v943
    %v946 = vmul.f32 0.5, %v945
    %v947 = vsub.f32 1.5, %v946
    %v948 = vmul.f32 %v943, %v947
    %vm949 = vweird.f32 %v833
    %vm950 = vweird.f32 %v943
    %vm951 = vmor %vm949, %vm950
    %v952 = vsel %vm951, %v943, %v948
    %v953 = vrsqrt.pop %v834
    %v954 = vmul.f32 %v953, %v834
    %v955 = vmul.f32 %v954, %v953
    %v956 = vmul.f32 0.5, %v955
    %v957 = vsub.f32 1.5, %v956
    %v958 = vmul.f32 %v953, %v957
    %vm959 = vweird.f32 %v834
    %vm960 = vweird.f32 %v953
    %vm961 = vmor %vm959, %vm960
    %v962 = vsel %vm961, %v953, %v958
    %v963 = vrsqrt.pop %v835
    %v964 = vmul.f32 %v963, %v835
    %v965 = vmul.f32 %v964, %v963
    %v966 = vmul.f32 0.5, %v965
    %v967 = vsub.f32 1.5, %v966
    %v968 = vmul.f32 %v963, %v967
    %vm969 = vweird.f32 %v835
    %vm970 = vweird.f32 %v963
    %vm971 = vmor %vm969, %vm970
    %v972 = vsel %vm971, %v963, %v968
    %v973 = vrsqrt.pop %v836
    %v974 = vmul.f32 %v973, %v836
    %v975 = vmul.f32 %v974, %v973
    %v976 = vmul.f32 0.5, %v975
    %v977 = vsub.f32 1.5, %v976
    %v978 = vmul.f32 %v973, %v977
    %vm979 = vweird.f32 %v836
    %vm980 = vweird.f32 %v973
    %vm981 = vmor %vm979, %vm980
    %v982 = vsel %vm981, %v973, %v978
    %v983 = vrsqrt.pop %v837
    %v984 = vmul.f32 %v983, %v837
    %v985 = vmul.f32 %v984, %v983
    %v986 = vmul.f32 0.5, %v985
    %v987 = vsub.f32 1.5, %v986
    %v988 = vmul.f32 %v983, %v987
    %vm989 = vweird.f32 %v837
    %vm990 = vweird.f32 %v983
    %vm991 = vmor %vm989, %vm990
    %v992 = vsel %vm991, %v983, %v988
    %v993 = vrsqrt.pop %v838
    %v994 = vmul.f32 %v993, %v838
    %v995 = vmul.f32 %v994, %v993
    %v996 = vmul.f32 0.5, %v995
    %v997 = vsub.f32 1.5, %v996
    %v998 = vmul.f32 %v993, %v997
    %vm999 = vweird.f32 %v838
    %vm1000 = vweird.f32 %v993
    %vm1001 = vmor %vm999, %vm1000
    %v1002 = vsel %vm1001, %v993, %v998
    %v1003 = vrsqrt.pop %v839
    %v1004 = vmul.f32 %v1003, %v839
    %v1005 = vmul.f32 %v1004, %v1003
    %v1006 = vmul.f32 0.5, %v1005
    %v1007 = vsub.f32 1.5, %v1006
    %v1008 = vmul.f32 %v1003, %v1007
    %vm1009 = vweird.f32 %v839
    %vm1010 = vweird.f32 %v1003
    %vm1011 = vmor %vm1009, %vm1010
    %v1012 = vsel %vm1011, %v1003, %v1008
    %v1013 = vrsqrt.pop %v840
    %v1014 = vmul.f32 %v1013, %v840
    %v1015 = vmul.f32 %v1014, %v1013
    %v1016 = vmul.f32 0.5, %v1015
    %v1017 = vsub.f32 1.5, %v1016
    %v1018 = vmul.f32 %v1013, %v1017
    %vm1019 = vweird.f32 %v840
    %vm1020 = vweird.f32 %v1013
    %vm1021 = vmor %vm1019, %vm1020
    %v1022 = vsel %vm1021, %v1013, %v1018
    %v1023 = vrsqrt.pop %v841
    %v1024 = vmul.f32 %v1023, %v841
    %v1025 = vmul.f32 %v1024, %v1023
    %v1026 = vmul.f32 0.5, %v1025
    %v1027 = vsub.f32 1.5, %v1026
    %v1028 = vmul.f32 %v1023, %v1027
    %vm1029 = vweird.f32 %v841
    %vm1030 = vweird.f32 %v1023
    %vm1031 = vmor %vm1029, %vm1030
    %v1032 = vsel %vm1031, %v1023, %v1028
    %v1033 = vrsqrt.pop %v842
    %v1034 = vmul.f32 %v1033, %v842
    %v1035 = vmul.f32 %v1034, %v1033
    %v1036 = vmul.f32 0.5, %v1035
    %v1037 = vsub.f32 1.5, %v1036
    %v1038 = vmul.f32 %v1033, %v1037
    %vm1039 = vweird.f32 %v842
    %vm1040 = vweird.f32 %v1033
    %vm1041 = vmor %vm1039, %vm1040
    %v1042 = vsel %vm1041, %v1033, %v1038
    %v1043 = vrsqrt.pop %v843
    %v1044 = vmul.f32 %v1043, %v843
    %v1045 = vmul.f32 %v1044, %v1043
    %v1046 = vmul.f32 0.5, %v1045
    %v1047 = vsub.f32 1.5, %v1046
    %v1048 = vmul.f32 %v1043, %v1047
    %vm1049 = vweird.f32 %v843
    %vm1050 = vweird.f32 %v1043
    %vm1051 = vmor %vm1049, %vm1050
    %v1052 = vsel %vm1051, %v1043, %v1048
    %v1053 = vrsqrt.pop %v844
    %v1054 = vmul.f32 %v1053, %v844
    %v1055 = vmul.f32 %v1054, %v1053
    %v1056 = vmul.f32 0.5, %v1055
    %v1057 = vsub.f32 1.5, %v1056
    %v1058 = vmul.f32 %v1053, %v1057
    %vm1059 = vweird.f32 %v844
    %vm1060 = vweird.f32 %v1053
    %vm1061 = vmor %vm1059, %vm1060
    %v1062 = vsel %vm1061, %v1053, %v1058
    %v1063 = vrsqrt.pop %v845
    %v1064 = vmul.f32 %v1063, %v845
    %v1065 = vmul.f32 %v1064, %v1063
    %v1066 = vmul.f32 0.5, %v1065
    %v1067 = vsub.f32 1.5, %v1066
    %v1068 = vmul.f32 %v1063, %v1067
    %vm1069 = vweird.f32 %v845
    %vm1070 = vweird.f32 %v1063
    %vm1071 = vmor %vm1069, %vm1070
    %v1072 = vsel %vm1071, %v1063, %v1068
    %v1073 = vrsqrt.pop %v846
    %v1074 = vmul.f32 %v1073, %v846
    %v1075 = vmul.f32 %v1074, %v1073
    %v1076 = vmul.f32 0.5, %v1075
    %v1077 = vsub.f32 1.5, %v1076
    %v1078 = vmul.f32 %v1073, %v1077
    %vm1079 = vweird.f32 %v846
    %vm1080 = vweird.f32 %v1073
    %vm1081 = vmor %vm1079, %vm1080
    %v1082 = vsel %vm1081, %v1073, %v1078
    %v1083 = vrsqrt.pop %v847
    %v1084 = vmul.f32 %v1083, %v847
    %v1085 = vmul.f32 %v1084, %v1083
    %v1086 = vmul.f32 0.5, %v1085
    %v1087 = vsub.f32 1.5, %v1086
    %v1088 = vmul.f32 %v1083, %v1087
    %vm1089 = vweird.f32 %v847
    %vm1090 = vweird.f32 %v1083
    %vm1091 = vmor %vm1089, %vm1090
    %v1092 = vsel %vm1091, %v1083, %v1088
    %v1093 = vrsqrt.pop %v848
    %v1094 = vmul.f32 %v1093, %v848
    %v1095 = vmul.f32 %v1094, %v1093
    %v1096 = vmul.f32 0.5, %v1095
    %v1097 = vsub.f32 1.5, %v1096
    %v1098 = vmul.f32 %v1093, %v1097
    %vm1099 = vweird.f32 %v848
    %vm1100 = vweird.f32 %v1093
    %vm1101 = vmor %vm1099, %vm1100
    %v1102 = vsel %vm1101, %v1093, %v1098
    %v1103 = vrsqrt.pop %v849
    %v1104 = vmul.f32 %v1103, %v849
    %v1105 = vmul.f32 %v1104, %v1103
    %v1106 = vmul.f32 0.5, %v1105
    %v1107 = vsub.f32 1.5, %v1106
    %v1108 = vmul.f32 %v1103, %v1107
    %vm1109 = vweird.f32 %v849
    %vm1110 = vweird.f32 %v1103
    %vm1111 = vmor %vm1109, %vm1110
    %v1112 = vsel %vm1111, %v1103, %v1108
    %v1113 = vrsqrt.pop %v850
    %v1114 = vmul.f32 %v1113, %v850
    %v1115 = vmul.f32 %v1114, %v1113
    %v1116 = vmul.f32 0.5, %v1115
    %v1117 = vsub.f32 1.5, %v1116
    %v1118 = vmul.f32 %v1113, %v1117
    %vm1119 = vweird.f32 %v850
    %vm1120 = vweird.f32 %v1113
    %vm1121 = vmor %vm1119, %vm1120
    %v1122 = vsel %vm1121, %v1113, %v1118
    %v1123 = vrsqrt.pop %v851
    %v1124 = vmul.f32 %v1123, %v851
    %v1125 = vmul.f32 %v1124, %v1123
    %v1126 = vmul.f32 0.5, %v1125
    %v1127 = vsub.f32 1.5, %v1126
    %v1128 = vmul.f32 %v1123, %v1127
    %vm1129 = vweird.f32 %v851
    %vm1130 = vweird.f32 %v1123
    %vm1131 = vmor %vm1129, %vm1130
    %v1132 = vsel %vm1131, %v1123, %v1128
    %v1133 = vrsqrt.pop %v852
    %v1134 = vmul.f32 %v1133, %v852
    %v1135 = vmul.f32 %v1134, %v1133
    %v1136 = vmul.f32 0.5, %v1135
    %v1137 = vsub.f32 1.5, %v1136
    %v1138 = vmul.f32 %v1133, %v1137
    %vm1139 = vweird.f32 %v852
    %vm1140 = vweird.f32 %v1133
    %vm1141 = vmor %vm1139, %vm1140
    %v1142 = vsel %vm1141, %v1133, %v1138
    %v1143 = vrsqrt.pop %v853
    %v1144 = vmul.f32 %v1143, %v853
    %v1145 = vmul.f32 %v1144, %v1143
    %v1146 = vmul.f32 0.5, %v1145
    %v1147 = vsub.f32 1.5, %v1146
    %v1148 = vmul.f32 %v1143, %v1147
    %vm1149 = vweird.f32 %v853
    %vm1150 = vweird.f32 %v1143
    %vm1151 = vmor %vm1149, %vm1150
    %v1152 = vsel %vm1151, %v1143, %v1148
    %v1153 = vrsqrt.pop %v854
    %v1154 = vmul.f32 %v1153, %v854
    %v1155 = vmul.f32 %v1154, %v1153
    %v1156 = vmul.f32 0.5, %v1155
    %v1157 = vsub.f32 1.5, %v1156
    %v1158 = vmul.f32 %v1153, %v1157
    %vm1159 = vweird.f32 %v854
    %vm1160 = vweird.f32 %v1153
    %vm1161 = vmor %vm1159, %vm1160
    %v1162 = vsel %vm1161, %v1153, %v1158
    %v1163 = vrsqrt.pop %v855
    %v1164 = vmul.f32 %v1163, %v855
    %v1165 = vmul.f32 %v1164, %v1163
    %v1166 = vmul.f32 0.5, %v1165
    %v1167 = vsub.f32 1.5, %v1166
    %v1168 = vmul.f32 %v1163, %v1167
    %vm1169 = vweird.f32 %v855
    %vm1170 = vweird.f32 %v1163
    %vm1171 = vmor %vm1169, %vm1170
    %v1172 = vsel %vm1171, %v1163, %v1168
    %v1173 = vrsqrt.pop %v856
    %v1174 = vmul.f32 %v1173, %v856
    %v1175 = vmul.f32 %v1174, %v1173
    %v1176 = vmul.f32 0.5, %v1175
    %v1177 = vsub.f32 1.5, %v1176
    %v1178 = vmul.f32 %v1173, %v1177
    %vm1179 = vweird.f32 %v856
    %vm1180 = vweird.f32 %v1173
    %vm1181 = vmor %vm1179, %vm1180
    %v1182 = vsel %vm1181, %v1173, %v1178
    %v1183 = vrsqrt.pop %v857
    %v1184 = vmul.f32 %v1183, %v857
    %v1185 = vmul.f32 %v1184, %v1183
    %v1186 = vmul.f32 0.5, %v1185
    %v1187 = vsub.f32 1.5, %v1186
    %v1188 = vmul.f32 %v1183, %v1187
    %vm1189 = vweird.f32 %v857
    %vm1190 = vweird.f32 %v1183
    %vm1191 = vmor %vm1189, %vm1190
    %v1192 = vsel %vm1191, %v1183, %v1188
    %v1193 = vrsqrt.pop %v858
    %v1194 = vmul.f32 %v1193, %v858
    %v1195 = vmul.f32 %v1194, %v1193
    %v1196 = vmul.f32 0.5, %v1195
    %v1197 = vsub.f32 1.5, %v1196
    %v1198 = vmul.f32 %v1193, %v1197
    %vm1199 = vweird.f32 %v858
    %vm1200 = vweird.f32 %v1193
    %vm1201 = vmor %vm1199, %vm1200
    %v1202 = vsel %vm1201, %v1193, %v1198
    %v1203 = vrsqrt.pop %v859
    %v1204 = vmul.f32 %v1203, %v859
    %v1205 = vmul.f32 %v1204, %v1203
    %v1206 = vmul.f32 0.5, %v1205
    %v1207 = vsub.f32 1.5, %v1206
    %v1208 = vmul.f32 %v1203, %v1207
    %vm1209 = vweird.f32 %v859
    %vm1210 = vweird.f32 %v1203
    %vm1211 = vmor %vm1209, %vm1210
    %v1212 = vsel %vm1211, %v1203, %v1208
    %v1213 = vrsqrt.pop %v860
    %v1214 = vmul.f32 %v1213, %v860
    %v1215 = vmul.f32 %v1214, %v1213
    %v1216 = vmul.f32 0.5, %v1215
    %v1217 = vsub.f32 1.5, %v1216
    %v1218 = vmul.f32 %v1213, %v1217
    %vm1219 = vweird.f32 %v860
    %vm1220 = vweird.f32 %v1213
    %vm1221 = vmor %vm1219, %vm1220
    %v1222 = vsel %vm1221, %v1213, %v1218
    %v1223 = vrsqrt.pop %v861
    %v1224 = vmul.f32 %v1223, %v861
    %v1225 = vmul.f32 %v1224, %v1223
    %v1226 = vmul.f32 0.5, %v1225
    %v1227 = vsub.f32 1.5, %v1226
    %v1228 = vmul.f32 %v1223, %v1227
    %vm1229 = vweird.f32 %v861
    %vm1230 = vweird.f32 %v1223
    %vm1231 = vmor %vm1229, %vm1230
    %v1232 = vsel %vm1231, %v1223, %v1228
    %v1233 = vrsqrt.pop %v862
    %v1234 = vmul.f32 %v1233, %v862
    %v1235 = vmul.f32 %v1234, %v1233
    %v1236 = vmul.f32 0.5, %v1235
    %v1237 = vsub.f32 1.5, %v1236
    %v1238 = vmul.f32 %v1233, %v1237
    %vm1239 = vweird.f32 %v862
    %vm1240 = vweird.f32 %v1233
    %vm1241 = vmor %vm1239, %vm1240
    %v1242 = vsel %vm1241, %v1233, %v1238
    %v1243 = vmul.f32 %v787, %v872
    %v1244 = vmul.f32 %v788, %v882
    %v1245 = vmul.f32 %v789, %v892
    %v1246 = vmul.f32 %v790, %v902
    %v1247 = vmul.f32 %v791, %v912
    %v1248 = vmul.f32 %v792, %v922
    %v1249 = vmul.f32 %v793, %v932
    %v1250 = vmul.f32 %v794, %v942
    %v1251 = vmul.f32 %v795, %v952
    %v1252 = vmul.f32 %v796, %v962
    %v1253 = vmul.f32 %v797, %v972
    %v1254 = vmul.f32 %v798, %v982
    %v1255 = vmul.f32 %v799, %v992
    %v1256 = vmul.f32 %v800, %v1002
    %v1257 = vmul.f32 %v801, %v1012
    %v1258 = vmul.f32 %v802, %v1022
    %v1259 = vmul.f32 %v803, %v1032
    %v1260 = vmul.f32 %v804, %v1042
    %v1261 = vmul.f32 %v805, %v1052
    %v1262 = vmul.f32 %v806, %v1062
    %v1263 = vmul.f32 %v807, %v1072
    %v1264 = vmul.f32 %v808, %v1082
    %v1265 = vmul.f32 %v809, %v1092
    %v1266 = vmul.f32 %v810, %v1102
    %v1267 = vmul.f32 %v811, %v1112
    %v1268 = vmul.f32 %v812, %v1122
    %v1269 = vmul.f32 %v813, %v1132
    %v1270 = vmul.f32 %v814, %v1142
    %v1271 = vmul.f32 %v815, %v1152
    %v1272 = vmul.f32 %v816, %v1162
    %v1273 = vmul.f32 %v817, %v1172
    %v1274 = vmul.f32 %v818, %v1182
    %v1275 = vmul.f32 %v819, %v1192
    %v1276 = vmul.f32 %v820, %v1202
    %v1277 = vmul.f32 %v821, %v1212
    %v1278 = vmul.f32 %v822, %v1222
    %v1279 = vmul.f32 %v823, %v1232
    %v1280 = vmul.f32 %v824, %v1242
    %v1281 = vperm.slane %v321, 0
    %v1282 = vmul.f32 %v1243, %v1281
    %v1283 = vmul.f32 %v1244, %v1281
    %v1284 = vmul.f32 %v1245, %v1281
    %v1285 = vmul.f32 %v1246, %v1281
    %v1286 = vmul.f32 %v1247, %v1281
    %v1287 = vmul.f32 %v1248, %v1281
    %v1288 = vmul.f32 %v1249, %v1281
    %v1289 = vmul.f32 %v1250, %v1281
    %v1290 = vmul.f32 %v1251, %v1281
    %v1291 = vmul.f32 %v1252, %v1281
    %v1292 = vmul.f32 %v1253, %v1281
    %v1293 = vmul.f32 %v1254, %v1281
    %v1294 = vmul.f32 %v1255, %v1281
    %v1295 = vmul.f32 %v1256, %v1281
    %v1296 = vmul.f32 %v1257, %v1281
    %v1297 = vmul.f32 %v1258, %v1281
    %v1298 = vmul.f32 %v1259, %v1281
    %v1299 = vmul.f32 %v1260, %v1281
    %v1300 = vmul.f32 %v1261, %v1281
    %v1301 = vmul.f32 %v1262, %v1281
    %v1302 = vmul.f32 %v1263, %v1281
    %v1303 = vmul.f32 %v1264, %v1281
    %v1304 = vmul.f32 %v1265, %v1281
    %v1305 = vmul.f32 %v1266, %v1281
    %v1306 = vmul.f32 %v1267, %v1281
    %v1307 = vmul.f32 %v1268, %v1281
    %v1308 = vmul.f32 %v1269, %v1281
    %v1309 = vmul.f32 %v1270, %v1281
    %v1310 = vmul.f32 %v1271, %v1281
    %v1311 = vmul.f32 %v1272, %v1281
    %v1312 = vmul.f32 %v1273, %v1281
    %v1313 = vmul.f32 %v1274, %v1281
    %v1314 = vmul.f32 %v1275, %v1281
    %v1315 = vmul.f32 %v1276, %v1281
    %v1316 = vmul.f32 %v1277, %v1281
    %v1317 = vmul.f32 %v1278, %v1281
    %v1318 = vmul.f32 %v1279, %v1281
    %v1319 = vmul.f32 %v1280, %v1281
    %v1320 = vperm.slane %v322, 0
    %v1321 = vadd.f32 %v1282, %v1320
    %v1322 = vadd.f32 %v1283, %v1320
    %v1323 = vadd.f32 %v1284, %v1320
    %v1324 = vadd.f32 %v1285, %v1320
    %v1325 = vadd.f32 %v1286, %v1320
    %v1326 = vadd.f32 %v1287, %v1320
    %v1327 = vadd.f32 %v1288, %v1320
    %v1328 = vadd.f32 %v1289, %v1320
    %v1329 = vadd.f32 %v1290, %v1320
    %v1330 = vadd.f32 %v1291, %v1320
    %v1331 = vadd.f32 %v1292, %v1320
    %v1332 = vadd.f32 %v1293, %v1320
    %v1333 = vadd.f32 %v1294, %v1320
    %v1334 = vadd.f32 %v1295, %v1320
    %v1335 = vadd.f32 %v1296, %v1320
    %v1336 = vadd.f32 %v1297, %v1320
    %v1337 = vadd.f32 %v1298, %v1320
    %v1338 = vadd.f32 %v1299, %v1320
    %v1339 = vadd.f32 %v1300, %v1320
    %v1340 = vadd.f32 %v1301, %v1320
    %v1341 = vadd.f32 %v1302, %v1320
    %v1342 = vadd.f32 %v1303, %v1320
    %v1343 = vadd.f32 %v1304, %v1320
    %v1344 = vadd.f32 %v1305, %v1320
    %v1345 = vadd.f32 %v1306, %v1320
    %v1346 = vadd.f32 %v1307, %v1320
    %v1347 = vadd.f32 %v1308, %v1320
    %v1348 = vadd.f32 %v1309, %v1320
    %v1349 = vadd.f32 %v1310, %v1320
    %v1350 = vadd.f32 %v1311, %v1320
    %v1351 = vadd.f32 %v1312, %v1320
    %v1352 = vadd.f32 %v1313, %v1320
    %v1353 = vadd.f32 %v1314, %v1320
    %v1354 = vadd.f32 %v1315, %v1320
    %v1355 = vadd.f32 %v1316, %v1320
    %v1356 = vadd.f32 %v1317, %v1320
    %v1357 = vadd.f32 %v1318, %v1320
    %v1358 = vadd.f32 %v1319, %v1320
    %v1359 = vmax.f32 %v1321, 0.0
    %v1360 = vmax.f32 %v1322, 0.0
    %v1361 = vmax.f32 %v1323, 0.0
    %v1362 = vmax.f32 %v1324, 0.0
    %v1363 = vmax.f32 %v1325, 0.0
    %v1364 = vmax.f32 %v1326, 0.0
    %v1365 = vmax.f32 %v1327, 0.0
    %v1366 = vmax.f32 %v1328, 0.0
    %v1367 = vmax.f32 %v1329, 0.0
    %v1368 = vmax.f32 %v1330, 0.0
    %v1369 = vmax.f32 %v1331, 0.0
    %v1370 = vmax.f32 %v1332, 0.0
    %v1371 = vmax.f32 %v1333, 0.0
    %v1372 = vmax.f32 %v1334, 0.0
    %v1373 = vmax.f32 %v1335, 0.0
    %v1374 = vmax.f32 %v1336, 0.0
    %v1375 = vmax.f32 %v1337, 0.0
    %v1376 = vmax.f32 %v1338, 0.0
    %v1377 = vmax.f32 %v1339, 0.0
    %v1378 = vmax.f32 %v1340, 0.0
    %v1379 = vmax.f32 %v1341, 0.0
    %v1380 = vmax.f32 %v1342, 0.0
    %v1381 = vmax.f32 %v1343, 0.0
    %v1382 = vmax.f32 %v1344, 0.0
    %v1383 = vmax.f32 %v1345, 0.0
    %v1384 = vmax.f32 %v1346, 0.0
    %v1385 = vmax.f32 %v1347, 0.0
    %v1386 = vmax.f32 %v1348, 0.0
    %v1387 = vmax.f32 %v1349, 0.0
    %v1388 = vmax.f32 %v1350, 0.0
    %v1389 = vmax.f32 %v1351, 0.0
    %v1390 = vmax.f32 %v1352, 0.0
    %v1391 = vmax.f32 %v1353, 0.0
    %v1392 = vmax.f32 %v1354, 0.0
    %v1393 = vmax.f32 %v1355, 0.0
    %v1394 = vmax.f32 %v1356, 0.0
    %v1395 = vmax.f32 %v1357, 0.0
    %v1396 = vmax.f32 %v1358, 0.0
    %v1397 = vpack.c.bf16 %v1360, %v1359
    %v1398 = vpack.c.bf16 %v1362, %v1361
    %v1399 = vpack.c.bf16 %v1364, %v1363
    %v1400 = vpack.c.bf16 %v1366, %v1365
    %v1401 = vpack.c.bf16 %v1368, %v1367
    %v1402 = vpack.c.bf16 %v1370, %v1369
    %v1403 = vpack.c.bf16 %v1372, %v1371
    %v1404 = vpack.c.bf16 %v1374, %v1373
    %v1405 = vpack.c.bf16 %v1376, %v1375
    %v1406 = vpack.c.bf16 %v1378, %v1377
    %v1407 = vpack.c.bf16 %v1380, %v1379
    %v1408 = vpack.c.bf16 %v1382, %v1381
    %v1409 = vpack.c.bf16 %v1384, %v1383
    %v1410 = vpack.c.bf16 %v1386, %v1385
    %v1411 = vpack.c.bf16 %v1388, %v1387
    %v1412 = vpack.c.bf16 %v1390, %v1389
    %v1413 = vpack.c.bf16 %v1392, %v1391
    %v1414 = vpack.c.bf16 %v1394, %v1393
    %v1415 = vpack.c.bf16 %v1396, %v1395
    %v1416 = vld [vmem:[%s1 + $0x10] sm:$0xf]
    %v1417 = vld [vmem:[%s1 + $0x14] sm:$0xf]
    %v1418 = vld [vmem:[%s1 + $0x18] sm:$0xf]
    %v1419 = vld [vmem:[%s1 + $0x1c] sm:$0xf]
    %v1420 = vld [vmem:[%s1 + $0x20] sm:$0xf]
    %v1421 = vld [vmem:[%s1 + $0x24] sm:$0xf]
    %v1422 = vld [vmem:[%s1 + $0x28] sm:$0xf]
    %v1423 = vld [vmem:[%s1 + $0x2c] sm:$0xf]
    %v1424 = vld [vmem:[%s1 + $0x8] sm:$0xf]
    %v1425 = vld [vmem:[%s1 + $0xc] sm:$0xf]
    %v1428 = vunpack.c.l.b16 %v1424
    %v1429 = vunpack.c.l.b16 %v1425
    %v1430 = vpack.c.b16 %v1429, %v1428
    %1432 = vmatpush.bf16.msra.mxu0 0
    %1433 = vmatpush.bf16.msra.mxu0 0
    %1434 = vmatpush.bf16.msra.mxu0 0
    %1435 = vmatpush.bf16.msra.mxu0 0
    %1436 = vmatpush.bf16.msra.mxu0 0
    %1437 = vmatpush.bf16.msra.mxu0 0
    %1438 = vmatpush.bf16.msra.mxu0 0
    %1439 = vmatpush.bf16.msra.mxu0 %v1430
    %1440 = vmatmul.bf16.gmra.mxu0 %v161
    %v1441 = vpop.f32.mrf.mxu0
    %v1442 = vadd.f32 0.0, %v1441
    %v1443 = vpop.f32.mrf.mxu0
    %v1444 = vadd.f32 0.0, %v1443
    %1445 = vmatmul.bf16.gmra.mxu0 %v164
    %v1446 = vpop.f32.mrf.mxu0
    %v1447 = vadd.f32 0.0, %v1446
    %v1448 = vpop.f32.mrf.mxu0
    %v1449 = vadd.f32 0.0, %v1448
    %1450 = vmatmul.bf16.gmra.mxu0 %v167
    %v1451 = vpop.f32.mrf.mxu0
    %v1452 = vadd.f32 0.0, %v1451
    %v1453 = vpop.f32.mrf.mxu0
    %v1454 = vadd.f32 0.0, %v1453
    %1455 = vmatmul.bf16.gmra.mxu0 %v170
    %v1456 = vpop.f32.mrf.mxu0
    %v1457 = vadd.f32 0.0, %v1456
    %v1458 = vpop.f32.mrf.mxu0
    %v1459 = vadd.f32 0.0, %v1458
    %1460 = vmatmul.bf16.gmra.mxu0 %v173
    %v1461 = vpop.f32.mrf.mxu0
    %v1462 = vadd.f32 0.0, %v1461
    %v1463 = vpop.f32.mrf.mxu0
    %v1464 = vadd.f32 0.0, %v1463
    %1465 = vmatmul.bf16.gmra.mxu0 %v176
    %v1466 = vpop.f32.mrf.mxu0
    %v1467 = vadd.f32 0.0, %v1466
    %v1468 = vpop.f32.mrf.mxu0
    %v1469 = vadd.f32 0.0, %v1468
    %1470 = vmatmul.bf16.gmra.mxu0 %v179
    %v1471 = vpop.f32.mrf.mxu0
    %v1472 = vadd.f32 0.0, %v1471
    %v1473 = vpop.f32.mrf.mxu0
    %v1474 = vadd.f32 0.0, %v1473
    %1475 = vmatmul.bf16.gmra.mxu0 %v182
    %v1476 = vpop.f32.mrf.mxu0
    %v1477 = vadd.f32 0.0, %v1476
    %v1478 = vpop.f32.mrf.mxu0
    %v1479 = vadd.f32 0.0, %v1478
    %1480 = vmatmul.bf16.gmra.mxu0 %v185
    %v1481 = vpop.f32.mrf.mxu0
    %v1482 = vadd.f32 0.0, %v1481
    %v1483 = vpop.f32.mrf.mxu0
    %v1484 = vadd.f32 0.0, %v1483
    %1485 = vmatmul.bf16.gmra.mxu0 %v188
    %v1486 = vpop.f32.mrf.mxu0
    %v1487 = vadd.f32 0.0, %v1486
    %v1488 = vpop.f32.mrf.mxu0
    %v1489 = vadd.f32 0.0, %v1488
    %1490 = vmatmul.bf16.gmra.mxu0 %v191
    %v1491 = vpop.f32.mrf.mxu0
    %v1492 = vadd.f32 0.0, %v1491
    %v1493 = vpop.f32.mrf.mxu0
    %v1494 = vadd.f32 0.0, %v1493
    %1495 = vmatmul.bf16.gmra.mxu0 %v194
    %v1496 = vpop.f32.mrf.mxu0
    %v1497 = vadd.f32 0.0, %v1496
    %v1498 = vpop.f32.mrf.mxu0
    %v1499 = vadd.f32 0.0, %v1498
    %1500 = vmatmul.bf16.gmra.mxu0 %v197
    %v1501 = vpop.f32.mrf.mxu0
    %v1502 = vadd.f32 0.0, %v1501
    %v1503 = vpop.f32.mrf.mxu0
    %v1504 = vadd.f32 0.0, %v1503
    %1505 = vmatmul.bf16.gmra.mxu0 %v200
    %v1506 = vpop.f32.mrf.mxu0
    %v1507 = vadd.f32 0.0, %v1506
    %v1508 = vpop.f32.mrf.mxu0
    %v1509 = vadd.f32 0.0, %v1508
    %1510 = vmatmul.bf16.gmra.mxu0 %v203
    %v1511 = vpop.f32.mrf.mxu0
    %v1512 = vadd.f32 0.0, %v1511
    %v1513 = vpop.f32.mrf.mxu0
    %v1514 = vadd.f32 0.0, %v1513
    %1515 = vmatmul.bf16.gmra.mxu0 %v206
    %v1516 = vpop.f32.mrf.mxu0
    %v1517 = vadd.f32 0.0, %v1516
    %v1518 = vpop.f32.mrf.mxu0
    %v1519 = vadd.f32 0.0, %v1518
    %1520 = vmatmul.bf16.gmra.mxu0 %v209
    %v1521 = vpop.f32.mrf.mxu0
    %v1522 = vadd.f32 0.0, %v1521
    %v1523 = vpop.f32.mrf.mxu0
    %v1524 = vadd.f32 0.0, %v1523
    %1525 = vmatmul.bf16.gmra.mxu0 %v212
    %v1526 = vpop.f32.mrf.mxu0
    %v1527 = vadd.f32 0.0, %v1526
    %v1528 = vpop.f32.mrf.mxu0
    %v1529 = vadd.f32 0.0, %v1528
    %1530 = vmatmul.bf16.gmra.mxu0 %v215
    %v1531 = vpop.f32.mrf.mxu0
    %v1532 = vadd.f32 0.0, %v1531
    %v1533 = vpop.f32.mrf.mxu0
    %v1534 = vadd.f32 0.0, %v1533
    %1535 = vdwg.mxu0
    %v1544 = vunpack.c.l.b16 %v1416
    %v1545 = vunpack.c.l.b16 %v1417
    %v1546 = vunpack.c.l.b16 %v1418
    %v1547 = vunpack.c.l.b16 %v1419
    %v1548 = vunpack.c.l.b16 %v1420
    %v1549 = vunpack.c.l.b16 %v1421
    %v1550 = vunpack.c.l.b16 %v1422
    %v1551 = vunpack.c.l.b16 %v1423
    %v1552 = vpack.c.b16 %v1545, %v1544
    %v1553 = vpack.c.b16 %v1547, %v1546
    %v1554 = vpack.c.b16 %v1549, %v1548
    %v1555 = vpack.c.b16 %v1551, %v1550
    %v1561 = vsel %vm323, %v1397, 0
    %v1564 = vsel %vm323, %v1398, 0
    %v1567 = vsel %vm323, %v1399, 0
    %v1570 = vsel %vm323, %v1400, 0
    %v1573 = vsel %vm323, %v1401, 0
    %v1576 = vsel %vm323, %v1402, 0
    %v1579 = vsel %vm323, %v1403, 0
    %v1582 = vsel %vm323, %v1404, 0
    %v1585 = vsel %vm323, %v1405, 0
    %v1588 = vsel %vm323, %v1406, 0
    %v1591 = vsel %vm323, %v1407, 0
    %v1594 = vsel %vm323, %v1408, 0
    %v1597 = vsel %vm323, %v1409, 0
    %v1600 = vsel %vm323, %v1410, 0
    %v1603 = vsel %vm323, %v1411, 0
    %v1606 = vsel %vm323, %v1412, 0
    %v1609 = vsel %vm323, %v1413, 0
    %v1612 = vsel %vm323, %v1414, 0
    %v1615 = vsel %vm323, %v1415, 0
    %1617 = vmatpush.bf16.msra.mxu0 0
    %1618 = vmatpush.bf16.msra.mxu0 0
    %1619 = vmatpush.bf16.msra.mxu0 0
    %1620 = vmatpush.bf16.msra.mxu0 0
    %1621 = vmatpush.bf16.msra.mxu0 %v1555
    %1622 = vmatpush.bf16.msra.mxu0 %v1554
    %1623 = vmatpush.bf16.msra.mxu0 %v1553
    %1624 = vmatpush.bf16.msra.mxu0 %v1552
    %1625 = vmatmul.bf16.gmra.mxu0 %v1561
    %v1626 = vpop.f32.mrf.mxu0
    %v1627 = vadd.f32 %v1442, %v1626
    %v1628 = vpop.f32.mrf.mxu0
    %v1629 = vadd.f32 %v1444, %v1628
    %1630 = vmatmul.bf16.gmra.mxu0 %v1564
    %v1631 = vpop.f32.mrf.mxu0
    %v1632 = vadd.f32 %v1447, %v1631
    %v1633 = vpop.f32.mrf.mxu0
    %v1634 = vadd.f32 %v1449, %v1633
    %1635 = vmatmul.bf16.gmra.mxu0 %v1567
    %v1636 = vpop.f32.mrf.mxu0
    %v1637 = vadd.f32 %v1452, %v1636
    %v1638 = vpop.f32.mrf.mxu0
    %v1639 = vadd.f32 %v1454, %v1638
    %1640 = vmatmul.bf16.gmra.mxu0 %v1570
    %v1641 = vpop.f32.mrf.mxu0
    %v1642 = vadd.f32 %v1457, %v1641
    %v1643 = vpop.f32.mrf.mxu0
    %v1644 = vadd.f32 %v1459, %v1643
    %1645 = vmatmul.bf16.gmra.mxu0 %v1573
    %v1646 = vpop.f32.mrf.mxu0
    %v1647 = vadd.f32 %v1462, %v1646
    %v1648 = vpop.f32.mrf.mxu0
    %v1649 = vadd.f32 %v1464, %v1648
    %1650 = vmatmul.bf16.gmra.mxu0 %v1576
    %v1651 = vpop.f32.mrf.mxu0
    %v1652 = vadd.f32 %v1467, %v1651
    %v1653 = vpop.f32.mrf.mxu0
    %v1654 = vadd.f32 %v1469, %v1653
    %1655 = vmatmul.bf16.gmra.mxu0 %v1579
    %v1656 = vpop.f32.mrf.mxu0
    %v1657 = vadd.f32 %v1472, %v1656
    %v1658 = vpop.f32.mrf.mxu0
    %v1659 = vadd.f32 %v1474, %v1658
    %1660 = vmatmul.bf16.gmra.mxu0 %v1582
    %v1661 = vpop.f32.mrf.mxu0
    %v1662 = vadd.f32 %v1477, %v1661
    %v1663 = vpop.f32.mrf.mxu0
    %v1664 = vadd.f32 %v1479, %v1663
    %1665 = vmatmul.bf16.gmra.mxu0 %v1585
    %v1666 = vpop.f32.mrf.mxu0
    %v1667 = vadd.f32 %v1482, %v1666
    %v1668 = vpop.f32.mrf.mxu0
    %v1669 = vadd.f32 %v1484, %v1668
    %1670 = vmatmul.bf16.gmra.mxu0 %v1588
    %v1671 = vpop.f32.mrf.mxu0
    %v1672 = vadd.f32 %v1487, %v1671
    %v1673 = vpop.f32.mrf.mxu0
    %v1674 = vadd.f32 %v1489, %v1673
    %1675 = vmatmul.bf16.gmra.mxu0 %v1591
    %v1676 = vpop.f32.mrf.mxu0
    %v1677 = vadd.f32 %v1492, %v1676
    %v1678 = vpop.f32.mrf.mxu0
    %v1679 = vadd.f32 %v1494, %v1678
    %1680 = vmatmul.bf16.gmra.mxu0 %v1594
    %v1681 = vpop.f32.mrf.mxu0
    %v1682 = vadd.f32 %v1497, %v1681
    %v1683 = vpop.f32.mrf.mxu0
    %v1684 = vadd.f32 %v1499, %v1683
    %1685 = vmatmul.bf16.gmra.mxu0 %v1597
    %v1686 = vpop.f32.mrf.mxu0
    %v1687 = vadd.f32 %v1502, %v1686
    %v1688 = vpop.f32.mrf.mxu0
    %v1689 = vadd.f32 %v1504, %v1688
    %1690 = vmatmul.bf16.gmra.mxu0 %v1600
    %v1691 = vpop.f32.mrf.mxu0
    %v1692 = vadd.f32 %v1507, %v1691
    %v1693 = vpop.f32.mrf.mxu0
    %v1694 = vadd.f32 %v1509, %v1693
    %1695 = vmatmul.bf16.gmra.mxu0 %v1603
    %v1696 = vpop.f32.mrf.mxu0
    %v1697 = vadd.f32 %v1512, %v1696
    %v1698 = vpop.f32.mrf.mxu0
    %v1699 = vadd.f32 %v1514, %v1698
    %1700 = vmatmul.bf16.gmra.mxu0 %v1606
    %v1701 = vpop.f32.mrf.mxu0
    %v1702 = vadd.f32 %v1517, %v1701
    %v1703 = vpop.f32.mrf.mxu0
    %v1704 = vadd.f32 %v1519, %v1703
    %1705 = vmatmul.bf16.gmra.mxu0 %v1609
    %v1706 = vpop.f32.mrf.mxu0
    %v1707 = vadd.f32 %v1522, %v1706
    %v1708 = vpop.f32.mrf.mxu0
    %v1709 = vadd.f32 %v1524, %v1708
    %1710 = vmatmul.bf16.gmra.mxu0 %v1612
    %v1711 = vpop.f32.mrf.mxu0
    %v1712 = vadd.f32 %v1527, %v1711
    %v1713 = vpop.f32.mrf.mxu0
    %v1714 = vadd.f32 %v1529, %v1713
    %1715 = vmatmul.bf16.gmra.mxu0 %v1615
    %v1716 = vpop.f32.mrf.mxu0
    %v1717 = vadd.f32 %v1532, %v1716
    %v1718 = vpop.f32.mrf.mxu0
    %v1719 = vadd.f32 %v1534, %v1718
    %1720 = vdwg.mxu0
    %v1721 = vld [vmem:[%s2 + $0x3] sm:$0x1]
    %v1722 = vperm.slane %v1721, 0
    %v1723 = vadd.f32 %v1627, %v1722
    %v1724 = vadd.f32 %v1629, %v1722
    %v1725 = vadd.f32 %v1632, %v1722
    %v1726 = vadd.f32 %v1634, %v1722
    %v1727 = vadd.f32 %v1637, %v1722
    %v1728 = vadd.f32 %v1639, %v1722
    %v1729 = vadd.f32 %v1642, %v1722
    %v1730 = vadd.f32 %v1644, %v1722
    %v1731 = vadd.f32 %v1647, %v1722
    %v1732 = vadd.f32 %v1649, %v1722
    %v1733 = vadd.f32 %v1652, %v1722
    %v1734 = vadd.f32 %v1654, %v1722
    %v1735 = vadd.f32 %v1657, %v1722
    %v1736 = vadd.f32 %v1659, %v1722
    %v1737 = vadd.f32 %v1662, %v1722
    %v1738 = vadd.f32 %v1664, %v1722
    %v1739 = vadd.f32 %v1667, %v1722
    %v1740 = vadd.f32 %v1669, %v1722
    %v1741 = vadd.f32 %v1672, %v1722
    %v1742 = vadd.f32 %v1674, %v1722
    %v1743 = vadd.f32 %v1677, %v1722
    %v1744 = vadd.f32 %v1679, %v1722
    %v1745 = vadd.f32 %v1682, %v1722
    %v1746 = vadd.f32 %v1684, %v1722
    %v1747 = vadd.f32 %v1687, %v1722
    %v1748 = vadd.f32 %v1689, %v1722
    %v1749 = vadd.f32 %v1692, %v1722
    %v1750 = vadd.f32 %v1694, %v1722
    %v1751 = vadd.f32 %v1697, %v1722
    %v1752 = vadd.f32 %v1699, %v1722
    %v1753 = vadd.f32 %v1702, %v1722
    %v1754 = vadd.f32 %v1704, %v1722
    %v1755 = vadd.f32 %v1707, %v1722
    %v1756 = vadd.f32 %v1709, %v1722
    %v1757 = vadd.f32 %v1712, %v1722
    %v1758 = vadd.f32 %v1714, %v1722
    %v1759 = vadd.f32 %v1717, %v1722
    %v1760 = vadd.f32 %v1719, %v1722
    %v1761 = vld [vmem:[%s2 + $0x4] sm:$0x1]
    %v1762 = vld [vmem:[%s2 + $0x5] sm:$0x1]
    %v1763 = vsel %vm323, %v1723, 0.0
    %1764 = vadd.xlane.f32.xlu0 %v1763
    %v1765 = vpop.xlane.xlu0 %1764
    %v1766 = vsel %vm323, %v1724, 0.0
    %1767 = vadd.xlane.f32.xlu0 %v1766
    %v1768 = vpop.xlane.xlu0 %1767
    %v1769 = vsel %vm323, %v1725, 0.0
    %1770 = vadd.xlane.f32.xlu0 %v1769
    %v1771 = vpop.xlane.xlu0 %1770
    %v1772 = vsel %vm323, %v1726, 0.0
    %1773 = vadd.xlane.f32.xlu0 %v1772
    %v1774 = vpop.xlane.xlu0 %1773
    %v1775 = vsel %vm323, %v1727, 0.0
    %1776 = vadd.xlane.f32.xlu0 %v1775
    %v1777 = vpop.xlane.xlu0 %1776
    %v1778 = vsel %vm323, %v1728, 0.0
    %1779 = vadd.xlane.f32.xlu0 %v1778
    %v1780 = vpop.xlane.xlu0 %1779
    %v1781 = vsel %vm323, %v1729, 0.0
    %1782 = vadd.xlane.f32.xlu0 %v1781
    %v1783 = vpop.xlane.xlu0 %1782
    %v1784 = vsel %vm323, %v1730, 0.0
    %1785 = vadd.xlane.f32.xlu0 %v1784
    %v1786 = vpop.xlane.xlu0 %1785
    %v1787 = vsel %vm323, %v1731, 0.0
    %1788 = vadd.xlane.f32.xlu0 %v1787
    %v1789 = vpop.xlane.xlu0 %1788
    %v1790 = vsel %vm323, %v1732, 0.0
    %1791 = vadd.xlane.f32.xlu0 %v1790
    %v1792 = vpop.xlane.xlu0 %1791
    %v1793 = vsel %vm323, %v1733, 0.0
    %1794 = vadd.xlane.f32.xlu0 %v1793
    %v1795 = vpop.xlane.xlu0 %1794
    %v1796 = vsel %vm323, %v1734, 0.0
    %1797 = vadd.xlane.f32.xlu0 %v1796
    %v1798 = vpop.xlane.xlu0 %1797
    %v1799 = vsel %vm323, %v1735, 0.0
    %1800 = vadd.xlane.f32.xlu0 %v1799
    %v1801 = vpop.xlane.xlu0 %1800
    %v1802 = vsel %vm323, %v1736, 0.0
    %1803 = vadd.xlane.f32.xlu0 %v1802
    %v1804 = vpop.xlane.xlu0 %1803
    %v1805 = vsel %vm323, %v1737, 0.0
    %1806 = vadd.xlane.f32.xlu0 %v1805
    %v1807 = vpop.xlane.xlu0 %1806
    %v1808 = vsel %vm323, %v1738, 0.0
    %1809 = vadd.xlane.f32.xlu0 %v1808
    %v1810 = vpop.xlane.xlu0 %1809
    %v1811 = vsel %vm323, %v1739, 0.0
    %1812 = vadd.xlane.f32.xlu0 %v1811
    %v1813 = vpop.xlane.xlu0 %1812
    %v1814 = vsel %vm323, %v1740, 0.0
    %1815 = vadd.xlane.f32.xlu0 %v1814
    %v1816 = vpop.xlane.xlu0 %1815
    %v1817 = vsel %vm323, %v1741, 0.0
    %1818 = vadd.xlane.f32.xlu0 %v1817
    %v1819 = vpop.xlane.xlu0 %1818
    %v1820 = vsel %vm323, %v1742, 0.0
    %1821 = vadd.xlane.f32.xlu0 %v1820
    %v1822 = vpop.xlane.xlu0 %1821
    %v1823 = vsel %vm323, %v1743, 0.0
    %1824 = vadd.xlane.f32.xlu0 %v1823
    %v1825 = vpop.xlane.xlu0 %1824
    %v1826 = vsel %vm323, %v1744, 0.0
    %1827 = vadd.xlane.f32.xlu0 %v1826
    %v1828 = vpop.xlane.xlu0 %1827
    %v1829 = vsel %vm323, %v1745, 0.0
    %1830 = vadd.xlane.f32.xlu0 %v1829
    %v1831 = vpop.xlane.xlu0 %1830
    %v1832 = vsel %vm323, %v1746, 0.0
    %1833 = vadd.xlane.f32.xlu0 %v1832
    %v1834 = vpop.xlane.xlu0 %1833
    %v1835 = vsel %vm323, %v1747, 0.0
    %1836 = vadd.xlane.f32.xlu0 %v1835
    %v1837 = vpop.xlane.xlu0 %1836
    %v1838 = vsel %vm323, %v1748, 0.0
    %1839 = vadd.xlane.f32.xlu0 %v1838
    %v1840 = vpop.xlane.xlu0 %1839
    %v1841 = vsel %vm323, %v1749, 0.0
    %1842 = vadd.xlane.f32.xlu0 %v1841
    %v1843 = vpop.xlane.xlu0 %1842
    %v1844 = vsel %vm323, %v1750, 0.0
    %1845 = vadd.xlane.f32.xlu0 %v1844
    %v1846 = vpop.xlane.xlu0 %1845
    %v1847 = vsel %vm323, %v1751, 0.0
    %1848 = vadd.xlane.f32.xlu0 %v1847
    %v1849 = vpop.xlane.xlu0 %1848
    %v1850 = vsel %vm323, %v1752, 0.0
    %1851 = vadd.xlane.f32.xlu0 %v1850
    %v1852 = vpop.xlane.xlu0 %1851
    %v1853 = vsel %vm323, %v1753, 0.0
    %1854 = vadd.xlane.f32.xlu0 %v1853
    %v1855 = vpop.xlane.xlu0 %1854
    %v1856 = vsel %vm323, %v1754, 0.0
    %1857 = vadd.xlane.f32.xlu0 %v1856
    %v1858 = vpop.xlane.xlu0 %1857
    %v1859 = vsel %vm323, %v1755, 0.0
    %1860 = vadd.xlane.f32.xlu0 %v1859
    %v1861 = vpop.xlane.xlu0 %1860
    %v1862 = vsel %vm323, %v1756, 0.0
    %1863 = vadd.xlane.f32.xlu0 %v1862
    %v1864 = vpop.xlane.xlu0 %1863
    %v1865 = vsel %vm323, %v1757, 0.0
    %1866 = vadd.xlane.f32.xlu0 %v1865
    %v1867 = vpop.xlane.xlu0 %1866
    %v1868 = vsel %vm323, %v1758, 0.0
    %1869 = vadd.xlane.f32.xlu0 %v1868
    %v1870 = vpop.xlane.xlu0 %1869
    %v1871 = vsel %vm323, %v1759, 0.0
    %1872 = vadd.xlane.f32.xlu0 %v1871
    %v1873 = vpop.xlane.xlu0 %1872
    %v1874 = vsel %vm323, %v1760, 0.0
    %1875 = vadd.xlane.f32.xlu0 %v1874
    %v1876 = vpop.xlane.xlu0 %1875
    %v1877 = vmul.f32 %v1765, %v444
    %v1878 = vmul.f32 %v1768, %v444
    %v1879 = vmul.f32 %v1771, %v444
    %v1880 = vmul.f32 %v1774, %v444
    %v1881 = vmul.f32 %v1777, %v444
    %v1882 = vmul.f32 %v1780, %v444
    %v1883 = vmul.f32 %v1783, %v444
    %v1884 = vmul.f32 %v1786, %v444
    %v1885 = vmul.f32 %v1789, %v444
    %v1886 = vmul.f32 %v1792, %v444
    %v1887 = vmul.f32 %v1795, %v444
    %v1888 = vmul.f32 %v1798, %v444
    %v1889 = vmul.f32 %v1801, %v444
    %v1890 = vmul.f32 %v1804, %v444
    %v1891 = vmul.f32 %v1807, %v444
    %v1892 = vmul.f32 %v1810, %v444
    %v1893 = vmul.f32 %v1813, %v444
    %v1894 = vmul.f32 %v1816, %v444
    %v1895 = vmul.f32 %v1819, %v444
    %v1896 = vmul.f32 %v1822, %v444
    %v1897 = vmul.f32 %v1825, %v444
    %v1898 = vmul.f32 %v1828, %v444
    %v1899 = vmul.f32 %v1831, %v444
    %v1900 = vmul.f32 %v1834, %v444
    %v1901 = vmul.f32 %v1837, %v444
    %v1902 = vmul.f32 %v1840, %v444
    %v1903 = vmul.f32 %v1843, %v444
    %v1904 = vmul.f32 %v1846, %v444
    %v1905 = vmul.f32 %v1849, %v444
    %v1906 = vmul.f32 %v1852, %v444
    %v1907 = vmul.f32 %v1855, %v444
    %v1908 = vmul.f32 %v1858, %v444
    %v1909 = vmul.f32 %v1861, %v444
    %v1910 = vmul.f32 %v1864, %v444
    %v1911 = vmul.f32 %v1867, %v444
    %v1912 = vmul.f32 %v1870, %v444
    %v1913 = vmul.f32 %v1873, %v444
    %v1914 = vmul.f32 %v1876, %v444
    %v1915 = vmul.f32 %v1723, %v1723
    %v1916 = vmul.f32 %v1724, %v1724
    %v1917 = vmul.f32 %v1725, %v1725
    %v1918 = vmul.f32 %v1726, %v1726
    %v1919 = vmul.f32 %v1727, %v1727
    %v1920 = vmul.f32 %v1728, %v1728
    %v1921 = vmul.f32 %v1729, %v1729
    %v1922 = vmul.f32 %v1730, %v1730
    %v1923 = vmul.f32 %v1731, %v1731
    %v1924 = vmul.f32 %v1732, %v1732
    %v1925 = vmul.f32 %v1733, %v1733
    %v1926 = vmul.f32 %v1734, %v1734
    %v1927 = vmul.f32 %v1735, %v1735
    %v1928 = vmul.f32 %v1736, %v1736
    %v1929 = vmul.f32 %v1737, %v1737
    %v1930 = vmul.f32 %v1738, %v1738
    %v1931 = vmul.f32 %v1739, %v1739
    %v1932 = vmul.f32 %v1740, %v1740
    %v1933 = vmul.f32 %v1741, %v1741
    %v1934 = vmul.f32 %v1742, %v1742
    %v1935 = vmul.f32 %v1743, %v1743
    %v1936 = vmul.f32 %v1744, %v1744
    %v1937 = vmul.f32 %v1745, %v1745
    %v1938 = vmul.f32 %v1746, %v1746
    %v1939 = vmul.f32 %v1747, %v1747
    %v1940 = vmul.f32 %v1748, %v1748
    %v1941 = vmul.f32 %v1749, %v1749
    %v1942 = vmul.f32 %v1750, %v1750
    %v1943 = vmul.f32 %v1751, %v1751
    %v1944 = vmul.f32 %v1752, %v1752
    %v1945 = vmul.f32 %v1753, %v1753
    %v1946 = vmul.f32 %v1754, %v1754
    %v1947 = vmul.f32 %v1755, %v1755
    %v1948 = vmul.f32 %v1756, %v1756
    %v1949 = vmul.f32 %v1757, %v1757
    %v1950 = vmul.f32 %v1758, %v1758
    %v1951 = vmul.f32 %v1759, %v1759
    %v1952 = vmul.f32 %v1760, %v1760
    %v1953 = vsel %vm323, %v1915, 0.0
    %1954 = vadd.xlane.f32.xlu0 %v1953
    %v1955 = vpop.xlane.xlu0 %1954
    %v1956 = vsel %vm323, %v1916, 0.0
    %1957 = vadd.xlane.f32.xlu0 %v1956
    %v1958 = vpop.xlane.xlu0 %1957
    %v1959 = vsel %vm323, %v1917, 0.0
    %1960 = vadd.xlane.f32.xlu0 %v1959
    %v1961 = vpop.xlane.xlu0 %1960
    %v1962 = vsel %vm323, %v1918, 0.0
    %1963 = vadd.xlane.f32.xlu0 %v1962
    %v1964 = vpop.xlane.xlu0 %1963
    %v1965 = vsel %vm323, %v1919, 0.0
    %1966 = vadd.xlane.f32.xlu0 %v1965
    %v1967 = vpop.xlane.xlu0 %1966
    %v1968 = vsel %vm323, %v1920, 0.0
    %1969 = vadd.xlane.f32.xlu0 %v1968
    %v1970 = vpop.xlane.xlu0 %1969
    %v1971 = vsel %vm323, %v1921, 0.0
    %1972 = vadd.xlane.f32.xlu0 %v1971
    %v1973 = vpop.xlane.xlu0 %1972
    %v1974 = vsel %vm323, %v1922, 0.0
    %1975 = vadd.xlane.f32.xlu0 %v1974
    %v1976 = vpop.xlane.xlu0 %1975
    %v1977 = vsel %vm323, %v1923, 0.0
    %1978 = vadd.xlane.f32.xlu0 %v1977
    %v1979 = vpop.xlane.xlu0 %1978
    %v1980 = vsel %vm323, %v1924, 0.0
    %1981 = vadd.xlane.f32.xlu0 %v1980
    %v1982 = vpop.xlane.xlu0 %1981
    %v1983 = vsel %vm323, %v1925, 0.0
    %1984 = vadd.xlane.f32.xlu0 %v1983
    %v1985 = vpop.xlane.xlu0 %1984
    %v1986 = vsel %vm323, %v1926, 0.0
    %1987 = vadd.xlane.f32.xlu0 %v1986
    %v1988 = vpop.xlane.xlu0 %1987
    %v1989 = vsel %vm323, %v1927, 0.0
    %1990 = vadd.xlane.f32.xlu0 %v1989
    %v1991 = vpop.xlane.xlu0 %1990
    %v1992 = vsel %vm323, %v1928, 0.0
    %1993 = vadd.xlane.f32.xlu0 %v1992
    %v1994 = vpop.xlane.xlu0 %1993
    %v1995 = vsel %vm323, %v1929, 0.0
    %1996 = vadd.xlane.f32.xlu0 %v1995
    %v1997 = vpop.xlane.xlu0 %1996
    %v1998 = vsel %vm323, %v1930, 0.0
    %1999 = vadd.xlane.f32.xlu0 %v1998
    %v2000 = vpop.xlane.xlu0 %1999
    %v2001 = vsel %vm323, %v1931, 0.0
    %2002 = vadd.xlane.f32.xlu0 %v2001
    %v2003 = vpop.xlane.xlu0 %2002
    %v2004 = vsel %vm323, %v1932, 0.0
    %2005 = vadd.xlane.f32.xlu0 %v2004
    %v2006 = vpop.xlane.xlu0 %2005
    %v2007 = vsel %vm323, %v1933, 0.0
    %2008 = vadd.xlane.f32.xlu0 %v2007
    %v2009 = vpop.xlane.xlu0 %2008
    %v2010 = vsel %vm323, %v1934, 0.0
    %2011 = vadd.xlane.f32.xlu0 %v2010
    %v2012 = vpop.xlane.xlu0 %2011
    %v2013 = vsel %vm323, %v1935, 0.0
    %2014 = vadd.xlane.f32.xlu0 %v2013
    %v2015 = vpop.xlane.xlu0 %2014
    %v2016 = vsel %vm323, %v1936, 0.0
    %2017 = vadd.xlane.f32.xlu0 %v2016
    %v2018 = vpop.xlane.xlu0 %2017
    %v2019 = vsel %vm323, %v1937, 0.0
    %2020 = vadd.xlane.f32.xlu0 %v2019
    %v2021 = vpop.xlane.xlu0 %2020
    %v2022 = vsel %vm323, %v1938, 0.0
    %2023 = vadd.xlane.f32.xlu0 %v2022
    %v2024 = vpop.xlane.xlu0 %2023
    %v2025 = vsel %vm323, %v1939, 0.0
    %2026 = vadd.xlane.f32.xlu0 %v2025
    %v2027 = vpop.xlane.xlu0 %2026
    %v2028 = vsel %vm323, %v1940, 0.0
    %2029 = vadd.xlane.f32.xlu0 %v2028
    %v2030 = vpop.xlane.xlu0 %2029
    %v2031 = vsel %vm323, %v1941, 0.0
    %2032 = vadd.xlane.f32.xlu0 %v2031
    %v2033 = vpop.xlane.xlu0 %2032
    %v2034 = vsel %vm323, %v1942, 0.0
    %2035 = vadd.xlane.f32.xlu0 %v2034
    %v2036 = vpop.xlane.xlu0 %2035
    %v2037 = vsel %vm323, %v1943, 0.0
    %2038 = vadd.xlane.f32.xlu0 %v2037
    %v2039 = vpop.xlane.xlu0 %2038
    %v2040 = vsel %vm323, %v1944, 0.0
    %2041 = vadd.xlane.f32.xlu0 %v2040
    %v2042 = vpop.xlane.xlu0 %2041
    %v2043 = vsel %vm323, %v1945, 0.0
    %2044 = vadd.xlane.f32.xlu0 %v2043
    %v2045 = vpop.xlane.xlu0 %2044
    %v2046 = vsel %vm323, %v1946, 0.0
    %2047 = vadd.xlane.f32.xlu0 %v2046
    %v2048 = vpop.xlane.xlu0 %2047
    %v2049 = vsel %vm323, %v1947, 0.0
    %2050 = vadd.xlane.f32.xlu0 %v2049
    %v2051 = vpop.xlane.xlu0 %2050
    %v2052 = vsel %vm323, %v1948, 0.0
    %2053 = vadd.xlane.f32.xlu0 %v2052
    %v2054 = vpop.xlane.xlu0 %2053
    %v2055 = vsel %vm323, %v1949, 0.0
    %2056 = vadd.xlane.f32.xlu0 %v2055
    %v2057 = vpop.xlane.xlu0 %2056
    %v2058 = vsel %vm323, %v1950, 0.0
    %2059 = vadd.xlane.f32.xlu0 %v2058
    %v2060 = vpop.xlane.xlu0 %2059
    %v2061 = vsel %vm323, %v1951, 0.0
    %2062 = vadd.xlane.f32.xlu0 %v2061
    %v2063 = vpop.xlane.xlu0 %2062
    %v2064 = vsel %vm323, %v1952, 0.0
    %2065 = vadd.xlane.f32.xlu0 %v2064
    %v2066 = vpop.xlane.xlu0 %2065
    %v2067 = vmul.f32 %v1955, %v444
    %v2068 = vmul.f32 %v1958, %v444
    %v2069 = vmul.f32 %v1961, %v444
    %v2070 = vmul.f32 %v1964, %v444
    %v2071 = vmul.f32 %v1967, %v444
    %v2072 = vmul.f32 %v1970, %v444
    %v2073 = vmul.f32 %v1973, %v444
    %v2074 = vmul.f32 %v1976, %v444
    %v2075 = vmul.f32 %v1979, %v444
    %v2076 = vmul.f32 %v1982, %v444
    %v2077 = vmul.f32 %v1985, %v444
    %v2078 = vmul.f32 %v1988, %v444
    %v2079 = vmul.f32 %v1991, %v444
    %v2080 = vmul.f32 %v1994, %v444
    %v2081 = vmul.f32 %v1997, %v444
    %v2082 = vmul.f32 %v2000, %v444
    %v2083 = vmul.f32 %v2003, %v444
    %v2084 = vmul.f32 %v2006, %v444
    %v2085 = vmul.f32 %v2009, %v444
    %v2086 = vmul.f32 %v2012, %v444
    %v2087 = vmul.f32 %v2015, %v444
    %v2088 = vmul.f32 %v2018, %v444
    %v2089 = vmul.f32 %v2021, %v444
    %v2090 = vmul.f32 %v2024, %v444
    %v2091 = vmul.f32 %v2027, %v444
    %v2092 = vmul.f32 %v2030, %v444
    %v2093 = vmul.f32 %v2033, %v444
    %v2094 = vmul.f32 %v2036, %v444
    %v2095 = vmul.f32 %v2039, %v444
    %v2096 = vmul.f32 %v2042, %v444
    %v2097 = vmul.f32 %v2045, %v444
    %v2098 = vmul.f32 %v2048, %v444
    %v2099 = vmul.f32 %v2051, %v444
    %v2100 = vmul.f32 %v2054, %v444
    %v2101 = vmul.f32 %v2057, %v444
    %v2102 = vmul.f32 %v2060, %v444
    %v2103 = vmul.f32 %v2063, %v444
    %v2104 = vmul.f32 %v2066, %v444
    %v2105 = vmul.f32 %v1877, %v1877
    %v2106 = vmul.f32 %v1878, %v1878
    %v2107 = vmul.f32 %v1879, %v1879
    %v2108 = vmul.f32 %v1880, %v1880
    %v2109 = vmul.f32 %v1881, %v1881
    %v2110 = vmul.f32 %v1882, %v1882
    %v2111 = vmul.f32 %v1883, %v1883
    %v2112 = vmul.f32 %v1884, %v1884
    %v2113 = vmul.f32 %v1885, %v1885
    %v2114 = vmul.f32 %v1886, %v1886
    %v2115 = vmul.f32 %v1887, %v1887
    %v2116 = vmul.f32 %v1888, %v1888
    %v2117 = vmul.f32 %v1889, %v1889
    %v2118 = vmul.f32 %v1890, %v1890
    %v2119 = vmul.f32 %v1891, %v1891
    %v2120 = vmul.f32 %v1892, %v1892
    %v2121 = vmul.f32 %v1893, %v1893
    %v2122 = vmul.f32 %v1894, %v1894
    %v2123 = vmul.f32 %v1895, %v1895
    %v2124 = vmul.f32 %v1896, %v1896
    %v2125 = vmul.f32 %v1897, %v1897
    %v2126 = vmul.f32 %v1898, %v1898
    %v2127 = vmul.f32 %v1899, %v1899
    %v2128 = vmul.f32 %v1900, %v1900
    %v2129 = vmul.f32 %v1901, %v1901
    %v2130 = vmul.f32 %v1902, %v1902
    %v2131 = vmul.f32 %v1903, %v1903
    %v2132 = vmul.f32 %v1904, %v1904
    %v2133 = vmul.f32 %v1905, %v1905
    %v2134 = vmul.f32 %v1906, %v1906
    %v2135 = vmul.f32 %v1907, %v1907
    %v2136 = vmul.f32 %v1908, %v1908
    %v2137 = vmul.f32 %v1909, %v1909
    %v2138 = vmul.f32 %v1910, %v1910
    %v2139 = vmul.f32 %v1911, %v1911
    %v2140 = vmul.f32 %v1912, %v1912
    %v2141 = vmul.f32 %v1913, %v1913
    %v2142 = vmul.f32 %v1914, %v1914
    %v2143 = vsub.f32 %v2067, %v2105
    %v2144 = vsub.f32 %v2068, %v2106
    %v2145 = vsub.f32 %v2069, %v2107
    %v2146 = vsub.f32 %v2070, %v2108
    %v2147 = vsub.f32 %v2071, %v2109
    %v2148 = vsub.f32 %v2072, %v2110
    %v2149 = vsub.f32 %v2073, %v2111
    %v2150 = vsub.f32 %v2074, %v2112
    %v2151 = vsub.f32 %v2075, %v2113
    %v2152 = vsub.f32 %v2076, %v2114
    %v2153 = vsub.f32 %v2077, %v2115
    %v2154 = vsub.f32 %v2078, %v2116
    %v2155 = vsub.f32 %v2079, %v2117
    %v2156 = vsub.f32 %v2080, %v2118
    %v2157 = vsub.f32 %v2081, %v2119
    %v2158 = vsub.f32 %v2082, %v2120
    %v2159 = vsub.f32 %v2083, %v2121
    %v2160 = vsub.f32 %v2084, %v2122
    %v2161 = vsub.f32 %v2085, %v2123
    %v2162 = vsub.f32 %v2086, %v2124
    %v2163 = vsub.f32 %v2087, %v2125
    %v2164 = vsub.f32 %v2088, %v2126
    %v2165 = vsub.f32 %v2089, %v2127
    %v2166 = vsub.f32 %v2090, %v2128
    %v2167 = vsub.f32 %v2091, %v2129
    %v2168 = vsub.f32 %v2092, %v2130
    %v2169 = vsub.f32 %v2093, %v2131
    %v2170 = vsub.f32 %v2094, %v2132
    %v2171 = vsub.f32 %v2095, %v2133
    %v2172 = vsub.f32 %v2096, %v2134
    %v2173 = vsub.f32 %v2097, %v2135
    %v2174 = vsub.f32 %v2098, %v2136
    %v2175 = vsub.f32 %v2099, %v2137
    %v2176 = vsub.f32 %v2100, %v2138
    %v2177 = vsub.f32 %v2101, %v2139
    %v2178 = vsub.f32 %v2102, %v2140
    %v2179 = vsub.f32 %v2103, %v2141
    %v2180 = vsub.f32 %v2104, %v2142
    %v2181 = vmax.f32 %v2143, 0.0
    %v2182 = vmax.f32 %v2144, 0.0
    %v2183 = vmax.f32 %v2145, 0.0
    %v2184 = vmax.f32 %v2146, 0.0
    %v2185 = vmax.f32 %v2147, 0.0
    %v2186 = vmax.f32 %v2148, 0.0
    %v2187 = vmax.f32 %v2149, 0.0
    %v2188 = vmax.f32 %v2150, 0.0
    %v2189 = vmax.f32 %v2151, 0.0
    %v2190 = vmax.f32 %v2152, 0.0
    %v2191 = vmax.f32 %v2153, 0.0
    %v2192 = vmax.f32 %v2154, 0.0
    %v2193 = vmax.f32 %v2155, 0.0
    %v2194 = vmax.f32 %v2156, 0.0
    %v2195 = vmax.f32 %v2157, 0.0
    %v2196 = vmax.f32 %v2158, 0.0
    %v2197 = vmax.f32 %v2159, 0.0
    %v2198 = vmax.f32 %v2160, 0.0
    %v2199 = vmax.f32 %v2161, 0.0
    %v2200 = vmax.f32 %v2162, 0.0
    %v2201 = vmax.f32 %v2163, 0.0
    %v2202 = vmax.f32 %v2164, 0.0
    %v2203 = vmax.f32 %v2165, 0.0
    %v2204 = vmax.f32 %v2166, 0.0
    %v2205 = vmax.f32 %v2167, 0.0
    %v2206 = vmax.f32 %v2168, 0.0
    %v2207 = vmax.f32 %v2169, 0.0
    %v2208 = vmax.f32 %v2170, 0.0
    %v2209 = vmax.f32 %v2171, 0.0
    %v2210 = vmax.f32 %v2172, 0.0
    %v2211 = vmax.f32 %v2173, 0.0
    %v2212 = vmax.f32 %v2174, 0.0
    %v2213 = vmax.f32 %v2175, 0.0
    %v2214 = vmax.f32 %v2176, 0.0
    %v2215 = vmax.f32 %v2177, 0.0
    %v2216 = vmax.f32 %v2178, 0.0
    %v2217 = vmax.f32 %v2179, 0.0
    %v2218 = vmax.f32 %v2180, 0.0
    %v2219 = vsub.f32 %v1723, %v1877
    %v2220 = vsub.f32 %v1724, %v1878
    %v2221 = vsub.f32 %v1725, %v1879
    %v2222 = vsub.f32 %v1726, %v1880
    %v2223 = vsub.f32 %v1727, %v1881
    %v2224 = vsub.f32 %v1728, %v1882
    %v2225 = vsub.f32 %v1729, %v1883
    %v2226 = vsub.f32 %v1730, %v1884
    %v2227 = vsub.f32 %v1731, %v1885
    %v2228 = vsub.f32 %v1732, %v1886
    %v2229 = vsub.f32 %v1733, %v1887
    %v2230 = vsub.f32 %v1734, %v1888
    %v2231 = vsub.f32 %v1735, %v1889
    %v2232 = vsub.f32 %v1736, %v1890
    %v2233 = vsub.f32 %v1737, %v1891
    %v2234 = vsub.f32 %v1738, %v1892
    %v2235 = vsub.f32 %v1739, %v1893
    %v2236 = vsub.f32 %v1740, %v1894
    %v2237 = vsub.f32 %v1741, %v1895
    %v2238 = vsub.f32 %v1742, %v1896
    %v2239 = vsub.f32 %v1743, %v1897
    %v2240 = vsub.f32 %v1744, %v1898
    %v2241 = vsub.f32 %v1745, %v1899
    %v2242 = vsub.f32 %v1746, %v1900
    %v2243 = vsub.f32 %v1747, %v1901
    %v2244 = vsub.f32 %v1748, %v1902
    %v2245 = vsub.f32 %v1749, %v1903
    %v2246 = vsub.f32 %v1750, %v1904
    %v2247 = vsub.f32 %v1751, %v1905
    %v2248 = vsub.f32 %v1752, %v1906
    %v2249 = vsub.f32 %v1753, %v1907
    %v2250 = vsub.f32 %v1754, %v1908
    %v2251 = vsub.f32 %v1755, %v1909
    %v2252 = vsub.f32 %v1756, %v1910
    %v2253 = vsub.f32 %v1757, %v1911
    %v2254 = vsub.f32 %v1758, %v1912
    %v2255 = vsub.f32 %v1759, %v1913
    %v2256 = vsub.f32 %v1760, %v1914
    %v2257 = vadd.f32 %v2181, 1e-05
    %v2258 = vadd.f32 %v2182, 1e-05
    %v2259 = vadd.f32 %v2183, 1e-05
    %v2260 = vadd.f32 %v2184, 1e-05
    %v2261 = vadd.f32 %v2185, 1e-05
    %v2262 = vadd.f32 %v2186, 1e-05
    %v2263 = vadd.f32 %v2187, 1e-05
    %v2264 = vadd.f32 %v2188, 1e-05
    %v2265 = vadd.f32 %v2189, 1e-05
    %v2266 = vadd.f32 %v2190, 1e-05
    %v2267 = vadd.f32 %v2191, 1e-05
    %v2268 = vadd.f32 %v2192, 1e-05
    %v2269 = vadd.f32 %v2193, 1e-05
    %v2270 = vadd.f32 %v2194, 1e-05
    %v2271 = vadd.f32 %v2195, 1e-05
    %v2272 = vadd.f32 %v2196, 1e-05
    %v2273 = vadd.f32 %v2197, 1e-05
    %v2274 = vadd.f32 %v2198, 1e-05
    %v2275 = vadd.f32 %v2199, 1e-05
    %v2276 = vadd.f32 %v2200, 1e-05
    %v2277 = vadd.f32 %v2201, 1e-05
    %v2278 = vadd.f32 %v2202, 1e-05
    %v2279 = vadd.f32 %v2203, 1e-05
    %v2280 = vadd.f32 %v2204, 1e-05
    %v2281 = vadd.f32 %v2205, 1e-05
    %v2282 = vadd.f32 %v2206, 1e-05
    %v2283 = vadd.f32 %v2207, 1e-05
    %v2284 = vadd.f32 %v2208, 1e-05
    %v2285 = vadd.f32 %v2209, 1e-05
    %v2286 = vadd.f32 %v2210, 1e-05
    %v2287 = vadd.f32 %v2211, 1e-05
    %v2288 = vadd.f32 %v2212, 1e-05
    %v2289 = vadd.f32 %v2213, 1e-05
    %v2290 = vadd.f32 %v2214, 1e-05
    %v2291 = vadd.f32 %v2215, 1e-05
    %v2292 = vadd.f32 %v2216, 1e-05
    %v2293 = vadd.f32 %v2217, 1e-05
    %v2294 = vadd.f32 %v2218, 1e-05
    %v2295 = vrsqrt.pop %v2257
    %v2296 = vmul.f32 %v2295, %v2257
    %v2297 = vmul.f32 %v2296, %v2295
    %v2298 = vmul.f32 0.5, %v2297
    %v2299 = vsub.f32 1.5, %v2298
    %v2300 = vmul.f32 %v2295, %v2299
    %vm2301 = vweird.f32 %v2257
    %vm2302 = vweird.f32 %v2295
    %vm2303 = vmor %vm2301, %vm2302
    %v2304 = vsel %vm2303, %v2295, %v2300
    %v2305 = vrsqrt.pop %v2258
    %v2306 = vmul.f32 %v2305, %v2258
    %v2307 = vmul.f32 %v2306, %v2305
    %v2308 = vmul.f32 0.5, %v2307
    %v2309 = vsub.f32 1.5, %v2308
    %v2310 = vmul.f32 %v2305, %v2309
    %vm2311 = vweird.f32 %v2258
    %vm2312 = vweird.f32 %v2305
    %vm2313 = vmor %vm2311, %vm2312
    %v2314 = vsel %vm2313, %v2305, %v2310
    %v2315 = vrsqrt.pop %v2259
    %v2316 = vmul.f32 %v2315, %v2259
    %v2317 = vmul.f32 %v2316, %v2315
    %v2318 = vmul.f32 0.5, %v2317
    %v2319 = vsub.f32 1.5, %v2318
    %v2320 = vmul.f32 %v2315, %v2319
    %vm2321 = vweird.f32 %v2259
    %vm2322 = vweird.f32 %v2315
    %vm2323 = vmor %vm2321, %vm2322
    %v2324 = vsel %vm2323, %v2315, %v2320
    %v2325 = vrsqrt.pop %v2260
    %v2326 = vmul.f32 %v2325, %v2260
    %v2327 = vmul.f32 %v2326, %v2325
    %v2328 = vmul.f32 0.5, %v2327
    %v2329 = vsub.f32 1.5, %v2328
    %v2330 = vmul.f32 %v2325, %v2329
    %vm2331 = vweird.f32 %v2260
    %vm2332 = vweird.f32 %v2325
    %vm2333 = vmor %vm2331, %vm2332
    %v2334 = vsel %vm2333, %v2325, %v2330
    %v2335 = vrsqrt.pop %v2261
    %v2336 = vmul.f32 %v2335, %v2261
    %v2337 = vmul.f32 %v2336, %v2335
    %v2338 = vmul.f32 0.5, %v2337
    %v2339 = vsub.f32 1.5, %v2338
    %v2340 = vmul.f32 %v2335, %v2339
    %vm2341 = vweird.f32 %v2261
    %vm2342 = vweird.f32 %v2335
    %vm2343 = vmor %vm2341, %vm2342
    %v2344 = vsel %vm2343, %v2335, %v2340
    %v2345 = vrsqrt.pop %v2262
    %v2346 = vmul.f32 %v2345, %v2262
    %v2347 = vmul.f32 %v2346, %v2345
    %v2348 = vmul.f32 0.5, %v2347
    %v2349 = vsub.f32 1.5, %v2348
    %v2350 = vmul.f32 %v2345, %v2349
    %vm2351 = vweird.f32 %v2262
    %vm2352 = vweird.f32 %v2345
    %vm2353 = vmor %vm2351, %vm2352
    %v2354 = vsel %vm2353, %v2345, %v2350
    %v2355 = vrsqrt.pop %v2263
    %v2356 = vmul.f32 %v2355, %v2263
    %v2357 = vmul.f32 %v2356, %v2355
    %v2358 = vmul.f32 0.5, %v2357
    %v2359 = vsub.f32 1.5, %v2358
    %v2360 = vmul.f32 %v2355, %v2359
    %vm2361 = vweird.f32 %v2263
    %vm2362 = vweird.f32 %v2355
    %vm2363 = vmor %vm2361, %vm2362
    %v2364 = vsel %vm2363, %v2355, %v2360
    %v2365 = vrsqrt.pop %v2264
    %v2366 = vmul.f32 %v2365, %v2264
    %v2367 = vmul.f32 %v2366, %v2365
    %v2368 = vmul.f32 0.5, %v2367
    %v2369 = vsub.f32 1.5, %v2368
    %v2370 = vmul.f32 %v2365, %v2369
    %vm2371 = vweird.f32 %v2264
    %vm2372 = vweird.f32 %v2365
    %vm2373 = vmor %vm2371, %vm2372
    %v2374 = vsel %vm2373, %v2365, %v2370
    %v2375 = vrsqrt.pop %v2265
    %v2376 = vmul.f32 %v2375, %v2265
    %v2377 = vmul.f32 %v2376, %v2375
    %v2378 = vmul.f32 0.5, %v2377
    %v2379 = vsub.f32 1.5, %v2378
    %v2380 = vmul.f32 %v2375, %v2379
    %vm2381 = vweird.f32 %v2265
    %vm2382 = vweird.f32 %v2375
    %vm2383 = vmor %vm2381, %vm2382
    %v2384 = vsel %vm2383, %v2375, %v2380
    %v2385 = vrsqrt.pop %v2266
    %v2386 = vmul.f32 %v2385, %v2266
    %v2387 = vmul.f32 %v2386, %v2385
    %v2388 = vmul.f32 0.5, %v2387
    %v2389 = vsub.f32 1.5, %v2388
    %v2390 = vmul.f32 %v2385, %v2389
    %vm2391 = vweird.f32 %v2266
    %vm2392 = vweird.f32 %v2385
    %vm2393 = vmor %vm2391, %vm2392
    %v2394 = vsel %vm2393, %v2385, %v2390
    %v2395 = vrsqrt.pop %v2267
    %v2396 = vmul.f32 %v2395, %v2267
    %v2397 = vmul.f32 %v2396, %v2395
    %v2398 = vmul.f32 0.5, %v2397
    %v2399 = vsub.f32 1.5, %v2398
    %v2400 = vmul.f32 %v2395, %v2399
    %vm2401 = vweird.f32 %v2267
    %vm2402 = vweird.f32 %v2395
    %vm2403 = vmor %vm2401, %vm2402
    %v2404 = vsel %vm2403, %v2395, %v2400
    %v2405 = vrsqrt.pop %v2268
    %v2406 = vmul.f32 %v2405, %v2268
    %v2407 = vmul.f32 %v2406, %v2405
    %v2408 = vmul.f32 0.5, %v2407
    %v2409 = vsub.f32 1.5, %v2408
    %v2410 = vmul.f32 %v2405, %v2409
    %vm2411 = vweird.f32 %v2268
    %vm2412 = vweird.f32 %v2405
    %vm2413 = vmor %vm2411, %vm2412
    %v2414 = vsel %vm2413, %v2405, %v2410
    %v2415 = vrsqrt.pop %v2269
    %v2416 = vmul.f32 %v2415, %v2269
    %v2417 = vmul.f32 %v2416, %v2415
    %v2418 = vmul.f32 0.5, %v2417
    %v2419 = vsub.f32 1.5, %v2418
    %v2420 = vmul.f32 %v2415, %v2419
    %vm2421 = vweird.f32 %v2269
    %vm2422 = vweird.f32 %v2415
    %vm2423 = vmor %vm2421, %vm2422
    %v2424 = vsel %vm2423, %v2415, %v2420
    %v2425 = vrsqrt.pop %v2270
    %v2426 = vmul.f32 %v2425, %v2270
    %v2427 = vmul.f32 %v2426, %v2425
    %v2428 = vmul.f32 0.5, %v2427
    %v2429 = vsub.f32 1.5, %v2428
    %v2430 = vmul.f32 %v2425, %v2429
    %vm2431 = vweird.f32 %v2270
    %vm2432 = vweird.f32 %v2425
    %vm2433 = vmor %vm2431, %vm2432
    %v2434 = vsel %vm2433, %v2425, %v2430
    %v2435 = vrsqrt.pop %v2271
    %v2436 = vmul.f32 %v2435, %v2271
    %v2437 = vmul.f32 %v2436, %v2435
    %v2438 = vmul.f32 0.5, %v2437
    %v2439 = vsub.f32 1.5, %v2438
    %v2440 = vmul.f32 %v2435, %v2439
    %vm2441 = vweird.f32 %v2271
    %vm2442 = vweird.f32 %v2435
    %vm2443 = vmor %vm2441, %vm2442
    %v2444 = vsel %vm2443, %v2435, %v2440
    %v2445 = vrsqrt.pop %v2272
    %v2446 = vmul.f32 %v2445, %v2272
    %v2447 = vmul.f32 %v2446, %v2445
    %v2448 = vmul.f32 0.5, %v2447
    %v2449 = vsub.f32 1.5, %v2448
    %v2450 = vmul.f32 %v2445, %v2449
    %vm2451 = vweird.f32 %v2272
    %vm2452 = vweird.f32 %v2445
    %vm2453 = vmor %vm2451, %vm2452
    %v2454 = vsel %vm2453, %v2445, %v2450
    %v2455 = vrsqrt.pop %v2273
    %v2456 = vmul.f32 %v2455, %v2273
    %v2457 = vmul.f32 %v2456, %v2455
    %v2458 = vmul.f32 0.5, %v2457
    %v2459 = vsub.f32 1.5, %v2458
    %v2460 = vmul.f32 %v2455, %v2459
    %vm2461 = vweird.f32 %v2273
    %vm2462 = vweird.f32 %v2455
    %vm2463 = vmor %vm2461, %vm2462
    %v2464 = vsel %vm2463, %v2455, %v2460
    %v2465 = vrsqrt.pop %v2274
    %v2466 = vmul.f32 %v2465, %v2274
    %v2467 = vmul.f32 %v2466, %v2465
    %v2468 = vmul.f32 0.5, %v2467
    %v2469 = vsub.f32 1.5, %v2468
    %v2470 = vmul.f32 %v2465, %v2469
    %vm2471 = vweird.f32 %v2274
    %vm2472 = vweird.f32 %v2465
    %vm2473 = vmor %vm2471, %vm2472
    %v2474 = vsel %vm2473, %v2465, %v2470
    %v2475 = vrsqrt.pop %v2275
    %v2476 = vmul.f32 %v2475, %v2275
    %v2477 = vmul.f32 %v2476, %v2475
    %v2478 = vmul.f32 0.5, %v2477
    %v2479 = vsub.f32 1.5, %v2478
    %v2480 = vmul.f32 %v2475, %v2479
    %vm2481 = vweird.f32 %v2275
    %vm2482 = vweird.f32 %v2475
    %vm2483 = vmor %vm2481, %vm2482
    %v2484 = vsel %vm2483, %v2475, %v2480
    %v2485 = vrsqrt.pop %v2276
    %v2486 = vmul.f32 %v2485, %v2276
    %v2487 = vmul.f32 %v2486, %v2485
    %v2488 = vmul.f32 0.5, %v2487
    %v2489 = vsub.f32 1.5, %v2488
    %v2490 = vmul.f32 %v2485, %v2489
    %vm2491 = vweird.f32 %v2276
    %vm2492 = vweird.f32 %v2485
    %vm2493 = vmor %vm2491, %vm2492
    %v2494 = vsel %vm2493, %v2485, %v2490
    %v2495 = vrsqrt.pop %v2277
    %v2496 = vmul.f32 %v2495, %v2277
    %v2497 = vmul.f32 %v2496, %v2495
    %v2498 = vmul.f32 0.5, %v2497
    %v2499 = vsub.f32 1.5, %v2498
    %v2500 = vmul.f32 %v2495, %v2499
    %vm2501 = vweird.f32 %v2277
    %vm2502 = vweird.f32 %v2495
    %vm2503 = vmor %vm2501, %vm2502
    %v2504 = vsel %vm2503, %v2495, %v2500
    %v2505 = vrsqrt.pop %v2278
    %v2506 = vmul.f32 %v2505, %v2278
    %v2507 = vmul.f32 %v2506, %v2505
    %v2508 = vmul.f32 0.5, %v2507
    %v2509 = vsub.f32 1.5, %v2508
    %v2510 = vmul.f32 %v2505, %v2509
    %vm2511 = vweird.f32 %v2278
    %vm2512 = vweird.f32 %v2505
    %vm2513 = vmor %vm2511, %vm2512
    %v2514 = vsel %vm2513, %v2505, %v2510
    %v2515 = vrsqrt.pop %v2279
    %v2516 = vmul.f32 %v2515, %v2279
    %v2517 = vmul.f32 %v2516, %v2515
    %v2518 = vmul.f32 0.5, %v2517
    %v2519 = vsub.f32 1.5, %v2518
    %v2520 = vmul.f32 %v2515, %v2519
    %vm2521 = vweird.f32 %v2279
    %vm2522 = vweird.f32 %v2515
    %vm2523 = vmor %vm2521, %vm2522
    %v2524 = vsel %vm2523, %v2515, %v2520
    %v2525 = vrsqrt.pop %v2280
    %v2526 = vmul.f32 %v2525, %v2280
    %v2527 = vmul.f32 %v2526, %v2525
    %v2528 = vmul.f32 0.5, %v2527
    %v2529 = vsub.f32 1.5, %v2528
    %v2530 = vmul.f32 %v2525, %v2529
    %vm2531 = vweird.f32 %v2280
    %vm2532 = vweird.f32 %v2525
    %vm2533 = vmor %vm2531, %vm2532
    %v2534 = vsel %vm2533, %v2525, %v2530
    %v2535 = vrsqrt.pop %v2281
    %v2536 = vmul.f32 %v2535, %v2281
    %v2537 = vmul.f32 %v2536, %v2535
    %v2538 = vmul.f32 0.5, %v2537
    %v2539 = vsub.f32 1.5, %v2538
    %v2540 = vmul.f32 %v2535, %v2539
    %vm2541 = vweird.f32 %v2281
    %vm2542 = vweird.f32 %v2535
    %vm2543 = vmor %vm2541, %vm2542
    %v2544 = vsel %vm2543, %v2535, %v2540
    %v2545 = vrsqrt.pop %v2282
    %v2546 = vmul.f32 %v2545, %v2282
    %v2547 = vmul.f32 %v2546, %v2545
    %v2548 = vmul.f32 0.5, %v2547
    %v2549 = vsub.f32 1.5, %v2548
    %v2550 = vmul.f32 %v2545, %v2549
    %vm2551 = vweird.f32 %v2282
    %vm2552 = vweird.f32 %v2545
    %vm2553 = vmor %vm2551, %vm2552
    %v2554 = vsel %vm2553, %v2545, %v2550
    %v2555 = vrsqrt.pop %v2283
    %v2556 = vmul.f32 %v2555, %v2283
    %v2557 = vmul.f32 %v2556, %v2555
    %v2558 = vmul.f32 0.5, %v2557
    %v2559 = vsub.f32 1.5, %v2558
    %v2560 = vmul.f32 %v2555, %v2559
    %vm2561 = vweird.f32 %v2283
    %vm2562 = vweird.f32 %v2555
    %vm2563 = vmor %vm2561, %vm2562
    %v2564 = vsel %vm2563, %v2555, %v2560
    %v2565 = vrsqrt.pop %v2284
    %v2566 = vmul.f32 %v2565, %v2284
    %v2567 = vmul.f32 %v2566, %v2565
    %v2568 = vmul.f32 0.5, %v2567
    %v2569 = vsub.f32 1.5, %v2568
    %v2570 = vmul.f32 %v2565, %v2569
    %vm2571 = vweird.f32 %v2284
    %vm2572 = vweird.f32 %v2565
    %vm2573 = vmor %vm2571, %vm2572
    %v2574 = vsel %vm2573, %v2565, %v2570
    %v2575 = vrsqrt.pop %v2285
    %v2576 = vmul.f32 %v2575, %v2285
    %v2577 = vmul.f32 %v2576, %v2575
    %v2578 = vmul.f32 0.5, %v2577
    %v2579 = vsub.f32 1.5, %v2578
    %v2580 = vmul.f32 %v2575, %v2579
    %vm2581 = vweird.f32 %v2285
    %vm2582 = vweird.f32 %v2575
    %vm2583 = vmor %vm2581, %vm2582
    %v2584 = vsel %vm2583, %v2575, %v2580
    %v2585 = vrsqrt.pop %v2286
    %v2586 = vmul.f32 %v2585, %v2286
    %v2587 = vmul.f32 %v2586, %v2585
    %v2588 = vmul.f32 0.5, %v2587
    %v2589 = vsub.f32 1.5, %v2588
    %v2590 = vmul.f32 %v2585, %v2589
    %vm2591 = vweird.f32 %v2286
    %vm2592 = vweird.f32 %v2585
    %vm2593 = vmor %vm2591, %vm2592
    %v2594 = vsel %vm2593, %v2585, %v2590
    %v2595 = vrsqrt.pop %v2287
    %v2596 = vmul.f32 %v2595, %v2287
    %v2597 = vmul.f32 %v2596, %v2595
    %v2598 = vmul.f32 0.5, %v2597
    %v2599 = vsub.f32 1.5, %v2598
    %v2600 = vmul.f32 %v2595, %v2599
    %vm2601 = vweird.f32 %v2287
    %vm2602 = vweird.f32 %v2595
    %vm2603 = vmor %vm2601, %vm2602
    %v2604 = vsel %vm2603, %v2595, %v2600
    %v2605 = vrsqrt.pop %v2288
    %v2606 = vmul.f32 %v2605, %v2288
    %v2607 = vmul.f32 %v2606, %v2605
    %v2608 = vmul.f32 0.5, %v2607
    %v2609 = vsub.f32 1.5, %v2608
    %v2610 = vmul.f32 %v2605, %v2609
    %vm2611 = vweird.f32 %v2288
    %vm2612 = vweird.f32 %v2605
    %vm2613 = vmor %vm2611, %vm2612
    %v2614 = vsel %vm2613, %v2605, %v2610
    %v2615 = vrsqrt.pop %v2289
    %v2616 = vmul.f32 %v2615, %v2289
    %v2617 = vmul.f32 %v2616, %v2615
    %v2618 = vmul.f32 0.5, %v2617
    %v2619 = vsub.f32 1.5, %v2618
    %v2620 = vmul.f32 %v2615, %v2619
    %vm2621 = vweird.f32 %v2289
    %vm2622 = vweird.f32 %v2615
    %vm2623 = vmor %vm2621, %vm2622
    %v2624 = vsel %vm2623, %v2615, %v2620
    %v2625 = vrsqrt.pop %v2290
    %v2626 = vmul.f32 %v2625, %v2290
    %v2627 = vmul.f32 %v2626, %v2625
    %v2628 = vmul.f32 0.5, %v2627
    %v2629 = vsub.f32 1.5, %v2628
    %v2630 = vmul.f32 %v2625, %v2629
    %vm2631 = vweird.f32 %v2290
    %vm2632 = vweird.f32 %v2625
    %vm2633 = vmor %vm2631, %vm2632
    %v2634 = vsel %vm2633, %v2625, %v2630
    %v2635 = vrsqrt.pop %v2291
    %v2636 = vmul.f32 %v2635, %v2291
    %v2637 = vmul.f32 %v2636, %v2635
    %v2638 = vmul.f32 0.5, %v2637
    %v2639 = vsub.f32 1.5, %v2638
    %v2640 = vmul.f32 %v2635, %v2639
    %vm2641 = vweird.f32 %v2291
    %vm2642 = vweird.f32 %v2635
    %vm2643 = vmor %vm2641, %vm2642
    %v2644 = vsel %vm2643, %v2635, %v2640
    %v2645 = vrsqrt.pop %v2292
    %v2646 = vmul.f32 %v2645, %v2292
    %v2647 = vmul.f32 %v2646, %v2645
    %v2648 = vmul.f32 0.5, %v2647
    %v2649 = vsub.f32 1.5, %v2648
    %v2650 = vmul.f32 %v2645, %v2649
    %vm2651 = vweird.f32 %v2292
    %vm2652 = vweird.f32 %v2645
    %vm2653 = vmor %vm2651, %vm2652
    %v2654 = vsel %vm2653, %v2645, %v2650
    %v2655 = vrsqrt.pop %v2293
    %v2656 = vmul.f32 %v2655, %v2293
    %v2657 = vmul.f32 %v2656, %v2655
    %v2658 = vmul.f32 0.5, %v2657
    %v2659 = vsub.f32 1.5, %v2658
    %v2660 = vmul.f32 %v2655, %v2659
    %vm2661 = vweird.f32 %v2293
    %vm2662 = vweird.f32 %v2655
    %vm2663 = vmor %vm2661, %vm2662
    %v2664 = vsel %vm2663, %v2655, %v2660
    %v2665 = vrsqrt.pop %v2294
    %v2666 = vmul.f32 %v2665, %v2294
    %v2667 = vmul.f32 %v2666, %v2665
    %v2668 = vmul.f32 0.5, %v2667
    %v2669 = vsub.f32 1.5, %v2668
    %v2670 = vmul.f32 %v2665, %v2669
    %vm2671 = vweird.f32 %v2294
    %vm2672 = vweird.f32 %v2665
    %vm2673 = vmor %vm2671, %vm2672
    %v2674 = vsel %vm2673, %v2665, %v2670
    %v2675 = vmul.f32 %v2219, %v2304
    %v2676 = vmul.f32 %v2220, %v2314
    %v2677 = vmul.f32 %v2221, %v2324
    %v2678 = vmul.f32 %v2222, %v2334
    %v2679 = vmul.f32 %v2223, %v2344
    %v2680 = vmul.f32 %v2224, %v2354
    %v2681 = vmul.f32 %v2225, %v2364
    %v2682 = vmul.f32 %v2226, %v2374
    %v2683 = vmul.f32 %v2227, %v2384
    %v2684 = vmul.f32 %v2228, %v2394
    %v2685 = vmul.f32 %v2229, %v2404
    %v2686 = vmul.f32 %v2230, %v2414
    %v2687 = vmul.f32 %v2231, %v2424
    %v2688 = vmul.f32 %v2232, %v2434
    %v2689 = vmul.f32 %v2233, %v2444
    %v2690 = vmul.f32 %v2234, %v2454
    %v2691 = vmul.f32 %v2235, %v2464
    %v2692 = vmul.f32 %v2236, %v2474
    %v2693 = vmul.f32 %v2237, %v2484
    %v2694 = vmul.f32 %v2238, %v2494
    %v2695 = vmul.f32 %v2239, %v2504
    %v2696 = vmul.f32 %v2240, %v2514
    %v2697 = vmul.f32 %v2241, %v2524
    %v2698 = vmul.f32 %v2242, %v2534
    %v2699 = vmul.f32 %v2243, %v2544
    %v2700 = vmul.f32 %v2244, %v2554
    %v2701 = vmul.f32 %v2245, %v2564
    %v2702 = vmul.f32 %v2246, %v2574
    %v2703 = vmul.f32 %v2247, %v2584
    %v2704 = vmul.f32 %v2248, %v2594
    %v2705 = vmul.f32 %v2249, %v2604
    %v2706 = vmul.f32 %v2250, %v2614
    %v2707 = vmul.f32 %v2251, %v2624
    %v2708 = vmul.f32 %v2252, %v2634
    %v2709 = vmul.f32 %v2253, %v2644
    %v2710 = vmul.f32 %v2254, %v2654
    %v2711 = vmul.f32 %v2255, %v2664
    %v2712 = vmul.f32 %v2256, %v2674
    %v2713 = vperm.slane %v1761, 0
    %v2714 = vmul.f32 %v2675, %v2713
    %v2715 = vmul.f32 %v2676, %v2713
    %v2716 = vmul.f32 %v2677, %v2713
    %v2717 = vmul.f32 %v2678, %v2713
    %v2718 = vmul.f32 %v2679, %v2713
    %v2719 = vmul.f32 %v2680, %v2713
    %v2720 = vmul.f32 %v2681, %v2713
    %v2721 = vmul.f32 %v2682, %v2713
    %v2722 = vmul.f32 %v2683, %v2713
    %v2723 = vmul.f32 %v2684, %v2713
    %v2724 = vmul.f32 %v2685, %v2713
    %v2725 = vmul.f32 %v2686, %v2713
    %v2726 = vmul.f32 %v2687, %v2713
    %v2727 = vmul.f32 %v2688, %v2713
    %v2728 = vmul.f32 %v2689, %v2713
    %v2729 = vmul.f32 %v2690, %v2713
    %v2730 = vmul.f32 %v2691, %v2713
    %v2731 = vmul.f32 %v2692, %v2713
    %v2732 = vmul.f32 %v2693, %v2713
    %v2733 = vmul.f32 %v2694, %v2713
    %v2734 = vmul.f32 %v2695, %v2713
    %v2735 = vmul.f32 %v2696, %v2713
    %v2736 = vmul.f32 %v2697, %v2713
    %v2737 = vmul.f32 %v2698, %v2713
    %v2738 = vmul.f32 %v2699, %v2713
    %v2739 = vmul.f32 %v2700, %v2713
    %v2740 = vmul.f32 %v2701, %v2713
    %v2741 = vmul.f32 %v2702, %v2713
    %v2742 = vmul.f32 %v2703, %v2713
    %v2743 = vmul.f32 %v2704, %v2713
    %v2744 = vmul.f32 %v2705, %v2713
    %v2745 = vmul.f32 %v2706, %v2713
    %v2746 = vmul.f32 %v2707, %v2713
    %v2747 = vmul.f32 %v2708, %v2713
    %v2748 = vmul.f32 %v2709, %v2713
    %v2749 = vmul.f32 %v2710, %v2713
    %v2750 = vmul.f32 %v2711, %v2713
    %v2751 = vmul.f32 %v2712, %v2713
    %v2752 = vperm.slane %v1762, 0
    %v2753 = vadd.f32 %v2714, %v2752
    %v2754 = vadd.f32 %v2715, %v2752
    %v2755 = vadd.f32 %v2716, %v2752
    %v2756 = vadd.f32 %v2717, %v2752
    %v2757 = vadd.f32 %v2718, %v2752
    %v2758 = vadd.f32 %v2719, %v2752
    %v2759 = vadd.f32 %v2720, %v2752
    %v2760 = vadd.f32 %v2721, %v2752
    %v2761 = vadd.f32 %v2722, %v2752
    %v2762 = vadd.f32 %v2723, %v2752
    %v2763 = vadd.f32 %v2724, %v2752
    %v2764 = vadd.f32 %v2725, %v2752
    %v2765 = vadd.f32 %v2726, %v2752
    %v2766 = vadd.f32 %v2727, %v2752
    %v2767 = vadd.f32 %v2728, %v2752
    %v2768 = vadd.f32 %v2729, %v2752
    %v2769 = vadd.f32 %v2730, %v2752
    %v2770 = vadd.f32 %v2731, %v2752
    %v2771 = vadd.f32 %v2732, %v2752
    %v2772 = vadd.f32 %v2733, %v2752
    %v2773 = vadd.f32 %v2734, %v2752
    %v2774 = vadd.f32 %v2735, %v2752
    %v2775 = vadd.f32 %v2736, %v2752
    %v2776 = vadd.f32 %v2737, %v2752
    %v2777 = vadd.f32 %v2738, %v2752
    %v2778 = vadd.f32 %v2739, %v2752
    %v2779 = vadd.f32 %v2740, %v2752
    %v2780 = vadd.f32 %v2741, %v2752
    %v2781 = vadd.f32 %v2742, %v2752
    %v2782 = vadd.f32 %v2743, %v2752
    %v2783 = vadd.f32 %v2744, %v2752
    %v2784 = vadd.f32 %v2745, %v2752
    %v2785 = vadd.f32 %v2746, %v2752
    %v2786 = vadd.f32 %v2747, %v2752
    %v2787 = vadd.f32 %v2748, %v2752
    %v2788 = vadd.f32 %v2749, %v2752
    %v2789 = vadd.f32 %v2750, %v2752
    %v2790 = vadd.f32 %v2751, %v2752
    %v2791 = vmax.f32 %v2753, 0.0
    %v2792 = vmax.f32 %v2754, 0.0
    %v2793 = vmax.f32 %v2755, 0.0
    %v2794 = vmax.f32 %v2756, 0.0
    %v2795 = vmax.f32 %v2757, 0.0
    %v2796 = vmax.f32 %v2758, 0.0
    %v2797 = vmax.f32 %v2759, 0.0
    %v2798 = vmax.f32 %v2760, 0.0
    %v2799 = vmax.f32 %v2761, 0.0
    %v2800 = vmax.f32 %v2762, 0.0
    %v2801 = vmax.f32 %v2763, 0.0
    %v2802 = vmax.f32 %v2764, 0.0
    %v2803 = vmax.f32 %v2765, 0.0
    %v2804 = vmax.f32 %v2766, 0.0
    %v2805 = vmax.f32 %v2767, 0.0
    %v2806 = vmax.f32 %v2768, 0.0
    %v2807 = vmax.f32 %v2769, 0.0
    %v2808 = vmax.f32 %v2770, 0.0
    %v2809 = vmax.f32 %v2771, 0.0
    %v2810 = vmax.f32 %v2772, 0.0
    %v2811 = vmax.f32 %v2773, 0.0
    %v2812 = vmax.f32 %v2774, 0.0
    %v2813 = vmax.f32 %v2775, 0.0
    %v2814 = vmax.f32 %v2776, 0.0
    %v2815 = vmax.f32 %v2777, 0.0
    %v2816 = vmax.f32 %v2778, 0.0
    %v2817 = vmax.f32 %v2779, 0.0
    %v2818 = vmax.f32 %v2780, 0.0
    %v2819 = vmax.f32 %v2781, 0.0
    %v2820 = vmax.f32 %v2782, 0.0
    %v2821 = vmax.f32 %v2783, 0.0
    %v2822 = vmax.f32 %v2784, 0.0
    %v2823 = vmax.f32 %v2785, 0.0
    %v2824 = vmax.f32 %v2786, 0.0
    %v2825 = vmax.f32 %v2787, 0.0
    %v2826 = vmax.f32 %v2788, 0.0
    %v2827 = vmax.f32 %v2789, 0.0
    %v2828 = vmax.f32 %v2790, 0.0
    %v2829 = vld [vmem:[%s2 + $0x8] sm:$0xff]
    %v2830 = vld [vmem:[%s2 + $0x6] sm:$0x1]
    %s2832 = vtos %v2830
    %v2833 = vstv %s2832
    %v2836 = vsel %vm323, %v2829, 0
    %v2839 = vsel %vm323, %v2791, 0
    %v2842 = vsel %vm323, %v2792, 0
    %v2845 = vsel %vm323, %v2793, 0
    %v2848 = vsel %vm323, %v2794, 0
    %v2851 = vsel %vm323, %v2795, 0
    %v2854 = vsel %vm323, %v2796, 0
    %v2857 = vsel %vm323, %v2797, 0
    %v2860 = vsel %vm323, %v2798, 0
    %v2863 = vsel %vm323, %v2799, 0
    %v2866 = vsel %vm323, %v2800, 0
    %v2869 = vsel %vm323, %v2801, 0
    %v2872 = vsel %vm323, %v2802, 0
    %v2875 = vsel %vm323, %v2803, 0
    %v2878 = vsel %vm323, %v2804, 0
    %v2881 = vsel %vm323, %v2805, 0
    %v2884 = vsel %vm323, %v2806, 0
    %v2887 = vsel %vm323, %v2807, 0
    %v2890 = vsel %vm323, %v2808, 0
    %v2893 = vsel %vm323, %v2809, 0
    %v2896 = vsel %vm323, %v2810, 0
    %v2899 = vsel %vm323, %v2811, 0
    %v2902 = vsel %vm323, %v2812, 0
    %v2905 = vsel %vm323, %v2813, 0
    %v2908 = vsel %vm323, %v2814, 0
    %v2911 = vsel %vm323, %v2815, 0
    %v2914 = vsel %vm323, %v2816, 0
    %v2917 = vsel %vm323, %v2817, 0
    %v2920 = vsel %vm323, %v2818, 0
    %v2923 = vsel %vm323, %v2819, 0
    %v2926 = vsel %vm323, %v2820, 0
    %v2929 = vsel %vm323, %v2821, 0
    %v2932 = vsel %vm323, %v2822, 0
    %v2935 = vsel %vm323, %v2823, 0
    %v2938 = vsel %vm323, %v2824, 0
    %v2941 = vsel %vm323, %v2825, 0
    %v2944 = vsel %vm323, %v2826, 0
    %v2947 = vsel %vm323, %v2827, 0
    %v2950 = vsel %vm323, %v2828, 0
    %2952 = vmatpush.xpose.msra.mxu0 %v2884
    %2953 = vmatpush.xpose.msra.mxu0 %v2881
    %2954 = vmatpush.xpose.msra.mxu0 %v2878
    %2955 = vmatpush.xpose.msra.mxu0 %v2875
    %2956 = vmatpush.xpose.msra.mxu0 %v2872
    %2957 = vmatpush.xpose.msra.mxu0 %v2869
    %2958 = vmatpush.xpose.msra.mxu0 %v2866
    %2959 = vmatpush.xpose.msra.mxu0 %v2863
    %2960 = vmatpush.xpose.msra.mxu0 %v2860
    %2961 = vmatpush.xpose.msra.mxu0 %v2857
    %2962 = vmatpush.xpose.msra.mxu0 %v2854
    %2963 = vmatpush.xpose.msra.mxu0 %v2851
    %2964 = vmatpush.xpose.msra.mxu0 %v2848
    %2965 = vmatpush.xpose.msra.mxu0 %v2845
    %2966 = vmatpush.xpose.msra.mxu0 %v2842
    %2967 = vmatpush.xpose.msra.mxu0 %v2839
    %2968 = vmatmul.f32.gmra.mxu0 %v2836
    %v2969 = vpop.f32.mrf.mxu0
    %v2970 = vadd.f32 %v2833, %v2969
    %2971 = vdwg.mxu0
    %2972 = vmatpush.xpose.msra.mxu0 %v2932
    %2973 = vmatpush.xpose.msra.mxu0 %v2929
    %2974 = vmatpush.xpose.msra.mxu0 %v2926
    %2975 = vmatpush.xpose.msra.mxu0 %v2923
    %2976 = vmatpush.xpose.msra.mxu0 %v2920
    %2977 = vmatpush.xpose.msra.mxu0 %v2917
    %2978 = vmatpush.xpose.msra.mxu0 %v2914
    %2979 = vmatpush.xpose.msra.mxu0 %v2911
    %2980 = vmatpush.xpose.msra.mxu0 %v2908
    %2981 = vmatpush.xpose.msra.mxu0 %v2905
    %2982 = vmatpush.xpose.msra.mxu0 %v2902
    %2983 = vmatpush.xpose.msra.mxu0 %v2899
    %2984 = vmatpush.xpose.msra.mxu0 %v2896
    %2985 = vmatpush.xpose.msra.mxu0 %v2893
    %2986 = vmatpush.xpose.msra.mxu0 %v2890
    %2987 = vmatpush.xpose.msra.mxu0 %v2887
    %2988 = vmatmul.f32.gmra.mxu0 %v2836
    %v2989 = vpop.f32.mrf.mxu0
    %v2990 = vadd.f32 %v2833, %v2989
    %2991 = vdwg.mxu0
    %2992 = vmatpush.xpose.msra.mxu0 0.0
    %2993 = vmatpush.xpose.msra.mxu0 0.0
    %2994 = vmatpush.xpose.msra.mxu0 0.0
    %2995 = vmatpush.xpose.msra.mxu0 0.0
    %2996 = vmatpush.xpose.msra.mxu0 0.0
    %2997 = vmatpush.xpose.msra.mxu0 0.0
    %2998 = vmatpush.xpose.msra.mxu0 0.0
    %2999 = vmatpush.xpose.msra.mxu0 0.0
    %3000 = vmatpush.xpose.msra.mxu0 0.0
    %3001 = vmatpush.xpose.msra.mxu0 0.0
    %3002 = vmatpush.xpose.msra.mxu0 %v2950
    %3003 = vmatpush.xpose.msra.mxu0 %v2947
    %3004 = vmatpush.xpose.msra.mxu0 %v2944
    %3005 = vmatpush.xpose.msra.mxu0 %v2941
    %3006 = vmatpush.xpose.msra.mxu0 %v2938
    %3007 = vmatpush.xpose.msra.mxu0 %v2935
    %3008 = vmatmul.f32.gmra.mxu0 %v2836
    %v3009 = vpop.f32.mrf.mxu0
    %v3010 = vadd.f32 %v2833, %v3009
    %3011 = vdwg.mxu0
    %3012 = vst [vmem:[#allocation2] sm:$0xff] %v2970
    %3013 = vst [vmem:[#allocation2 + $0x8] sm:$0xff] %v2990
    %vm3014 = vcmask 392192
    %3015 = vst.msk [vmem:[#allocation2 + $0x10] sm:$0xff] %vm3014, %v3010
    // Predicated region
    $region14: #{tpu_custom_call.1} parent=1 // pred_check
      _
    $region15: #{tpu_custom_call.1} parent=1 // pred_check_branch
      %3017 = sbr.rel (0) target = $region17
    $region16: #{tpu_custom_call.1} parent=1 // pred_region
      %3019 = vsyncadd [#allocation3], 0
      %s3021 = sshll.u32 [#allocation2], 4
      %s3022 = int_to_ptr.vmem [resolvable:$true] %s3021
      %s3023 = sshll.u32 %s3, 4
      %s3024 = int_to_ptr.hbm [resolvable:$true] %s3023
      %3026 = dma.vmem_to_hbm [thread:$0]  %s3022, 384, %s3024, [#allocation3]
    $region17: #{tpu_custom_call.1} parent=1 // pred_fallthru
      _
    // Predicated region
    $region18: #{tpu_custom_call.1} parent=1 // pred_check
      _
    $region19: #{tpu_custom_call.1} parent=1 // pred_check_branch
      %3028 = sbr.rel (0) target = $region21
    $region20: #{tpu_custom_call.1} parent=1 // pred_region
      %3030 = dma.done [#allocation3], 384
    $region21: #{tpu_custom_call.1} parent=1 // pred_fallthru
      _
    %3031 = vsyncpa [#allocation3], 1

</llo_original>
